<compile_context>
chip_gen: v7x
topology: tpu7x:2x2x1
jax: 0.10.0
libtpu: 0.0.40
codegen_flags: <defaults>
</compile_context>

<pallas_src>
import functools

import jax
import jax.numpy as jnp
import numpy as np
from jax import lax
from jax.experimental import pallas as pl
from jax.experimental.pallas import tpu as pltpu

EPS = 1e-5      # BatchNorm1d eps (track_running_stats=False -> always batch statistics)
LANE = 128      # lane-dense width of the single HBM output


# ------------------------------ fused Pallas kernel -------------------------------
def _fused_kernel(x_ref, w1_ref, g1_ref, b1_ref, w2_ref, g2_ref, b2_ref,
                  w3_ref, g3_ref, b3_ref, wdec_ref, bdec_ref, wcls_ref, bcls_ref,
                  o_ref, *, B, T):
    n_rows = B * T
    inv_n = 1.0 / float(n_rows)

    def reflect_pad(h2d, K):
        # h2d: (T*B, C) time-major rows (row = t*B + b); reflect-pad along time.
        left_n, right_n = (K - 1) // 2, K // 2
        parts = []
        for j in range(left_n):                  # padded time j      <- source time left_n - j
            s = (left_n - j) * B
            parts.append(h2d[s:s + B, :])
        parts.append(h2d)                        # padded times left_n .. left_n+T-1
        for m in range(right_n):                 # padded time left_n+T+m <- source time T-2-m
            s = (T - 2 - m) * B
            parts.append(h2d[s:s + B, :])
        return jnp.concatenate(parts, axis=0)    # ((T+K-1)*B, C)

    def conv_bn_relu(h2d, w_ref, g_ref, b_ref):
        # Conv1d as K accumulated shifted-window matmuls over the whole (B*T, Cin) slab
        # (bf16 MXU operands, f32 accumulation) + BatchNorm1d(batch stats) + ReLU.
        K = w_ref.shape[0]
        padded = reflect_pad(h2d, K).astype(jnp.bfloat16)
        acc = jnp.dot(padded[0:n_rows, :], w_ref[0],
                      preferred_element_type=jnp.float32)
        for k in range(1, K):
            acc = acc + jnp.dot(padded[k * B:k * B + n_rows, :], w_ref[k],
                                preferred_element_type=jnp.float32)
        mean = acc.sum(axis=0, keepdims=True) * inv_n          # over (batch, time)
        cen = acc - mean
        var = jnp.square(cen).sum(axis=0, keepdims=True) * inv_n
        y = cen * lax.rsqrt(var + EPS) * g_ref[...] + b_ref[...]
        return jnp.maximum(y, 0.0)

    # ---- encoder ----
    h = conv_bn_relu(x_ref[...], w1_ref, g1_ref, b1_ref)
    h = conv_bn_relu(h, w2_ref, g2_ref, b2_ref)
    h = conv_bn_relu(h, w3_ref, g3_ref, b3_ref)                # (T*B, D) f32

    # ---- decoder: AvgPool1d(D) + flatten + Linear ----
    # Pool windows are VPU adds of B-row slices; the flatten order (d-major, p-minor)
    # is folded into wdec at init, so each window needs one tiny (B, D) @ (D, dd) matmul.
    P, D, _ = wdec_ref.shape
    inv_D = 1.0 / float(D)
    dec = bdec_ref[...]                                        # (1, decode_dim), broadcasts
    for p in range(P):
        pooled = h[p * D * B:(p * D + 1) * B, :]
        for j in range(1, D):
            pooled = pooled + h[(p * D + j) * B:(p * D + j + 1) * B, :]
        dec = dec + jnp.dot(pooled * inv_D, wdec_ref[p],
                            preferred_element_type=jnp.float32)

    # ---- DownstreamNet head: concat over embedders (single -> identity) + Linear ----
    o_ref[...] = jnp.dot(dec, wcls_ref[...],
                         preferred_element_type=jnp.float32) + bcls_ref[...]


# ------------------------------ wrapper --------------------------------------------
def downstream_forward(x, p):
    B, T, C_in = x.shape
    # Layout plumbing only: present the input as a time-major (T*B, Cin) slab.
    x2d = jnp.transpose(x, (1, 0, 2)).reshape(T * B, C_in)
    args = (x2d, p["w1"], p["g1"], p["bb1"], p["w2"], p["g2"], p["bb2"],
            p["w3"], p["g3"], p["bb3"], p["wdec"], p["bdec"], p["wcls"], p["bcls"])
    kernel = functools.partial(_fused_kernel, B=B, T=T)
    return pl.pallas_call(
        kernel,
        out_shape=jax.ShapeDtypeStruct((B, LANE), jnp.float32),
        in_specs=[pl.BlockSpec(memory_space=pltpu.MemorySpace.VMEM)] * len(args),
        out_specs=pl.BlockSpec(memory_space=pltpu.MemorySpace.VMEM),
    )(*args)


# ------------------------------ pure-JAX reference ---------------------------------
def reference_forward(x, raw):
    B, T, _ = x.shape
    h = jnp.transpose(x, (0, 2, 1))          # (B, C, T), like the PyTorch encoder

    def block(h, w, g, bb, pad):
        hp = jnp.pad(h, ((0, 0), (0, 0), pad), mode="reflect")
        y = lax.conv_general_dilated(hp, w, window_strides=(1,), padding="VALID",
                                     dimension_numbers=("NCH", "OIH", "NCH"))
        mean = jnp.mean(y, axis=(0, 2), keepdims=True)
        var = jnp.mean(jnp.square(y - mean), axis=(0, 2), keepdims=True)
        y = (y - mean) * lax.rsqrt(var + EPS) * g[None, :, None] + bb[None, :, None]
        return jnp.maximum(y, 0.0)

    h = block(h, raw["w1"], raw["g1"], raw["bb1"], (3, 4))
    h = block(h, raw["w2"], raw["g2"], raw["bb2"], (2, 2))
    h = block(h, raw["w3"], raw["g3"], raw["bb3"], (1, 1))
    D = h.shape[1]
    P = T // D
    pooled = h[:, :, :P * D].reshape(B, D, P, D).mean(-1)       # AvgPool1d(D)
    dec = pooled.reshape(B, -1) @ raw["wl"] + raw["bl"]         # decoder linear
    emb = jnp.concatenate([dec], axis=1)                        # cat over embedders (1)
    return emb @ raw["wd"] + raw["bd"]                          # DownstreamNet head


# ------------------------------ parameters -----------------------------------------
def init_params(key, num_channels, temporal_len, embed_dim, decode_dim, classes,
                num_embedders=1):
    ks = jax.random.split(key, 13)
    C1, C2 = 128, 256
    D, T = embed_dim, temporal_len
    P = T // D

    def conv_w(k, cout, cin, K):
        return 0.1 * jax.random.normal(k, (cout, cin, K), jnp.float32)

    raw = dict(
        w1=conv_w(ks[0], C1, num_channels, 8),
        g1=1.0 + 0.1 * jax.random.normal(ks[1], (C1,), jnp.float32),
        bb1=0.1 * jax.random.normal(ks[2], (C1,), jnp.float32),
        w2=conv_w(ks[3], C2, C1, 5),
        g2=1.0 + 0.1 * jax.random.normal(ks[4], (C2,), jnp.float32),
        bb2=0.1 * jax.random.normal(ks[5], (C2,), jnp.float32),
        w3=conv_w(ks[6], D, C2, 3),
        g3=1.0 + 0.1 * jax.random.normal(ks[7], (D,), jnp.float32),
        bb3=0.1 * jax.random.normal(ks[8], (D,), jnp.float32),
        wl=0.1 * jax.random.normal(ks[9], (D * P, decode_dim), jnp.float32),
        bl=0.1 * jax.random.normal(ks[10], (decode_dim,), jnp.float32),
        wd=0.1 * jax.random.normal(ks[11], (num_embedders * decode_dim, classes),
                                   jnp.float32),
        bd=0.1 * jax.random.normal(ks[12], (classes,), jnp.float32),
    )
    # Conv1d biases are omitted: with batch-statistics BatchNorm they cancel exactly.

    # ---- pre-packed kernel params (done once, outside the forward path) ----
    def pack_conv(w):        # (Cout, Cin, K) -> (K, Cin, Cout), bf16 MXU operand
        return jnp.transpose(w, (2, 1, 0)).astype(jnp.bfloat16)

    def row(v):              # 1-D -> (1, C) f32 for in-kernel broadcasting
        return v.reshape(1, -1).astype(jnp.float32)

    # Decoder Linear weight regrouped per pooling window:
    # torch flat index of pooled (B, D, P) is d*P + p  ->  wdec[p, d, :] = wl[d*P + p, :].
    wdec = jnp.transpose(raw["wl"].reshape(D, P, decode_dim), (1, 0, 2)).astype(jnp.float32)

    # Lane-dense (128-wide) downstream head so the single HBM output store is unmasked.
    wcls = jnp.zeros((num_embedders * decode_dim, LANE), jnp.float32)
    wcls = wcls.at[:, :classes].set(raw["wd"])
    bcls = jnp.zeros((1, LANE), jnp.float32).at[:, :classes].set(raw["bd"])

    packed = dict(
        w1=pack_conv(raw["w1"]), g1=row(raw["g1"]), bb1=row(raw["bb1"]),
        w2=pack_conv(raw["w2"]), g2=row(raw["g2"]), bb2=row(raw["bb2"]),
        w3=pack_conv(raw["w3"]), g3=row(raw["g3"]), bb3=row(raw["bb3"]),
        wdec=wdec, bdec=row(raw["bl"]), wcls=wcls, bcls=bcls,
    )
    return raw, packed


# ------------------------------------ main ------------------------------------------
if __name__ == "__main__":
    B, T, C = 2, 16, 4          # batch, temporal_len, num_channels
    EMBED_DIM = 8               # encoder embed_dim (kept small; PyTorch default is 100)
    DECODE_DIM = 4              # embedder (decoder) output features
    CLASSES = 3                 # DownstreamNet classes

    key = jax.random.PRNGKey(0)
    k_x, k_p = jax.random.split(key)
    x = jax.random.normal(k_x, (B, T, C), jnp.float32)
    raw, packed = init_params(k_p, C, T, EMBED_DIM, DECODE_DIM, CLASSES)

    fwd = jax.jit(downstream_forward)
    out_padded = jax.block_until_ready(fwd(x, packed))
    out = np.asarray(out_padded)[:, :CLASSES]

    ref = np.asarray(jax.block_until_ready(reference_forward(x, raw)))
    # bf16 MXU operands in the conv matmuls -> slightly looser tolerance than pure f32.
    np.testing.assert_allclose(out, ref, rtol=2e-2, atol=2e-2)
    assert out.shape == (B, CLASSES)
    print("KERNEL_OK")
</pallas_src>

<mosaic_0001>
module attributes {stable_mosaic.version = 11 : i64} {
  func.func @_fused_kernel(%arg0: memref<32x4xf32, #tpu.memory_space<vmem>>, %arg1: memref<8x4x128xbf16, #tpu.memory_space<vmem>>, %arg2: memref<1x128xf32, #tpu.memory_space<vmem>>, %arg3: memref<1x128xf32, #tpu.memory_space<vmem>>, %arg4: memref<5x128x256xbf16, #tpu.memory_space<vmem>>, %arg5: memref<1x256xf32, #tpu.memory_space<vmem>>, %arg6: memref<1x256xf32, #tpu.memory_space<vmem>>, %arg7: memref<3x256x8xbf16, #tpu.memory_space<vmem>>, %arg8: memref<1x8xf32, #tpu.memory_space<vmem>>, %arg9: memref<1x8xf32, #tpu.memory_space<vmem>>, %arg10: memref<2x8x4xf32, #tpu.memory_space<vmem>>, %arg11: memref<1x4xf32, #tpu.memory_space<vmem>>, %arg12: memref<4x128xf32, #tpu.memory_space<vmem>>, %arg13: memref<1x128xf32, #tpu.memory_space<vmem>>, %arg14: memref<2x128xf32, #tpu.memory_space<vmem>>) attributes {dimension_semantics = [], scalar_prefetch = 0 : i64, scratch_operands = 0 : i64, tpu.core_type = #tpu.core_type<tc>} {
    %c0 = arith.constant 0 : index
    %c0_0 = arith.constant 0 : index
    %0 = vector.load %arg0[%c0, %c0_0] : memref<32x4xf32, #tpu.memory_space<vmem>>, vector<32x4xf32>
    %1 = vector.extract_strided_slice %0 {offsets = [6, 0], sizes = [2, 4], strides = [1, 1]} : vector<32x4xf32> to vector<2x4xf32>
    %2 = vector.extract_strided_slice %0 {offsets = [4, 0], sizes = [2, 4], strides = [1, 1]} : vector<32x4xf32> to vector<2x4xf32>
    %3 = vector.extract_strided_slice %0 {offsets = [2, 0], sizes = [2, 4], strides = [1, 1]} : vector<32x4xf32> to vector<2x4xf32>
    %4 = vector.extract_strided_slice %0 {offsets = [28, 0], sizes = [2, 4], strides = [1, 1]} : vector<32x4xf32> to vector<2x4xf32>
    %5 = vector.extract_strided_slice %0 {offsets = [26, 0], sizes = [2, 4], strides = [1, 1]} : vector<32x4xf32> to vector<2x4xf32>
    %6 = vector.extract_strided_slice %0 {offsets = [24, 0], sizes = [2, 4], strides = [1, 1]} : vector<32x4xf32> to vector<2x4xf32>
    %7 = vector.extract_strided_slice %0 {offsets = [22, 0], sizes = [2, 4], strides = [1, 1]} : vector<32x4xf32> to vector<2x4xf32>
    %8 = tpu.concatenate %1, %2, %3, %0, %4, %5, %6, %7 in 0 : vector<2x4xf32>, vector<2x4xf32>, vector<2x4xf32>, vector<32x4xf32>, vector<2x4xf32>, vector<2x4xf32>, vector<2x4xf32>, vector<2x4xf32> -> vector<46x4xf32>
    %9 = arith.truncf %8 : vector<46x4xf32> to vector<46x4xbf16>
    %10 = vector.extract_strided_slice %9 {offsets = [0, 0], sizes = [32, 4], strides = [1, 1]} : vector<46x4xbf16> to vector<32x4xbf16>
    %c0_1 = arith.constant 0 : index
    %c0_2 = arith.constant 0 : index
    %c0_3 = arith.constant 0 : index
    %11 = vector.load %arg1[%c0_1, %c0_2, %c0_3] : memref<8x4x128xbf16, #tpu.memory_space<vmem>>, vector<1x4x128xbf16>
    %12 = vector.shape_cast %11 : vector<1x4x128xbf16> to vector<4x128xbf16>
    %cst = arith.constant dense<0.000000e+00> : vector<32x128xf32>
    %13 = tpu.matmul %10, %12, %cst {dimension_numbers = #tpu.dot_dimension_numbers<[1], [0], [0], [1], [0, 0, 1, 1], [], []>} : vector<32x4xbf16>, vector<4x128xbf16>, vector<32x128xf32> -> vector<32x128xf32>
    %14 = vector.extract_strided_slice %9 {offsets = [2, 0], sizes = [32, 4], strides = [1, 1]} : vector<46x4xbf16> to vector<32x4xbf16>
    %c1 = arith.constant 1 : index
    %c0_4 = arith.constant 0 : index
    %c0_5 = arith.constant 0 : index
    %15 = vector.load %arg1[%c1, %c0_4, %c0_5] : memref<8x4x128xbf16, #tpu.memory_space<vmem>>, vector<1x4x128xbf16>
    %16 = vector.shape_cast %15 : vector<1x4x128xbf16> to vector<4x128xbf16>
    %cst_6 = arith.constant dense<0.000000e+00> : vector<32x128xf32>
    %17 = tpu.matmul %14, %16, %cst_6 {dimension_numbers = #tpu.dot_dimension_numbers<[1], [0], [0], [1], [0, 0, 1, 1], [], []>} : vector<32x4xbf16>, vector<4x128xbf16>, vector<32x128xf32> -> vector<32x128xf32>
    %18 = arith.addf %13, %17 : vector<32x128xf32>
    %19 = vector.extract_strided_slice %9 {offsets = [4, 0], sizes = [32, 4], strides = [1, 1]} : vector<46x4xbf16> to vector<32x4xbf16>
    %c2 = arith.constant 2 : index
    %c0_7 = arith.constant 0 : index
    %c0_8 = arith.constant 0 : index
    %20 = vector.load %arg1[%c2, %c0_7, %c0_8] : memref<8x4x128xbf16, #tpu.memory_space<vmem>>, vector<1x4x128xbf16>
    %21 = vector.shape_cast %20 : vector<1x4x128xbf16> to vector<4x128xbf16>
    %cst_9 = arith.constant dense<0.000000e+00> : vector<32x128xf32>
    %22 = tpu.matmul %19, %21, %cst_9 {dimension_numbers = #tpu.dot_dimension_numbers<[1], [0], [0], [1], [0, 0, 1, 1], [], []>} : vector<32x4xbf16>, vector<4x128xbf16>, vector<32x128xf32> -> vector<32x128xf32>
    %23 = arith.addf %18, %22 : vector<32x128xf32>
    %24 = vector.extract_strided_slice %9 {offsets = [6, 0], sizes = [32, 4], strides = [1, 1]} : vector<46x4xbf16> to vector<32x4xbf16>
    %c3 = arith.constant 3 : index
    %c0_10 = arith.constant 0 : index
    %c0_11 = arith.constant 0 : index
    %25 = vector.load %arg1[%c3, %c0_10, %c0_11] : memref<8x4x128xbf16, #tpu.memory_space<vmem>>, vector<1x4x128xbf16>
    %26 = vector.shape_cast %25 : vector<1x4x128xbf16> to vector<4x128xbf16>
    %cst_12 = arith.constant dense<0.000000e+00> : vector<32x128xf32>
    %27 = tpu.matmul %24, %26, %cst_12 {dimension_numbers = #tpu.dot_dimension_numbers<[1], [0], [0], [1], [0, 0, 1, 1], [], []>} : vector<32x4xbf16>, vector<4x128xbf16>, vector<32x128xf32> -> vector<32x128xf32>
    %28 = arith.addf %23, %27 : vector<32x128xf32>
    %29 = vector.extract_strided_slice %9 {offsets = [8, 0], sizes = [32, 4], strides = [1, 1]} : vector<46x4xbf16> to vector<32x4xbf16>
    %c4 = arith.constant 4 : index
    %c0_13 = arith.constant 0 : index
    %c0_14 = arith.constant 0 : index
    %30 = vector.load %arg1[%c4, %c0_13, %c0_14] : memref<8x4x128xbf16, #tpu.memory_space<vmem>>, vector<1x4x128xbf16>
    %31 = vector.shape_cast %30 : vector<1x4x128xbf16> to vector<4x128xbf16>
    %cst_15 = arith.constant dense<0.000000e+00> : vector<32x128xf32>
    %32 = tpu.matmul %29, %31, %cst_15 {dimension_numbers = #tpu.dot_dimension_numbers<[1], [0], [0], [1], [0, 0, 1, 1], [], []>} : vector<32x4xbf16>, vector<4x128xbf16>, vector<32x128xf32> -> vector<32x128xf32>
    %33 = arith.addf %28, %32 : vector<32x128xf32>
    %34 = vector.extract_strided_slice %9 {offsets = [10, 0], sizes = [32, 4], strides = [1, 1]} : vector<46x4xbf16> to vector<32x4xbf16>
    %c5 = arith.constant 5 : index
    %c0_16 = arith.constant 0 : index
    %c0_17 = arith.constant 0 : index
    %35 = vector.load %arg1[%c5, %c0_16, %c0_17] : memref<8x4x128xbf16, #tpu.memory_space<vmem>>, vector<1x4x128xbf16>
    %36 = vector.shape_cast %35 : vector<1x4x128xbf16> to vector<4x128xbf16>
    %cst_18 = arith.constant dense<0.000000e+00> : vector<32x128xf32>
    %37 = tpu.matmul %34, %36, %cst_18 {dimension_numbers = #tpu.dot_dimension_numbers<[1], [0], [0], [1], [0, 0, 1, 1], [], []>} : vector<32x4xbf16>, vector<4x128xbf16>, vector<32x128xf32> -> vector<32x128xf32>
    %38 = arith.addf %33, %37 : vector<32x128xf32>
    %39 = vector.extract_strided_slice %9 {offsets = [12, 0], sizes = [32, 4], strides = [1, 1]} : vector<46x4xbf16> to vector<32x4xbf16>
    %c6 = arith.constant 6 : index
    %c0_19 = arith.constant 0 : index
    %c0_20 = arith.constant 0 : index
    %40 = vector.load %arg1[%c6, %c0_19, %c0_20] : memref<8x4x128xbf16, #tpu.memory_space<vmem>>, vector<1x4x128xbf16>
    %41 = vector.shape_cast %40 : vector<1x4x128xbf16> to vector<4x128xbf16>
    %cst_21 = arith.constant dense<0.000000e+00> : vector<32x128xf32>
    %42 = tpu.matmul %39, %41, %cst_21 {dimension_numbers = #tpu.dot_dimension_numbers<[1], [0], [0], [1], [0, 0, 1, 1], [], []>} : vector<32x4xbf16>, vector<4x128xbf16>, vector<32x128xf32> -> vector<32x128xf32>
    %43 = arith.addf %38, %42 : vector<32x128xf32>
    %44 = vector.extract_strided_slice %9 {offsets = [14, 0], sizes = [32, 4], strides = [1, 1]} : vector<46x4xbf16> to vector<32x4xbf16>
    %c7 = arith.constant 7 : index
    %c0_22 = arith.constant 0 : index
    %c0_23 = arith.constant 0 : index
    %45 = vector.load %arg1[%c7, %c0_22, %c0_23] : memref<8x4x128xbf16, #tpu.memory_space<vmem>>, vector<1x4x128xbf16>
    %46 = vector.shape_cast %45 : vector<1x4x128xbf16> to vector<4x128xbf16>
    %cst_24 = arith.constant dense<0.000000e+00> : vector<32x128xf32>
    %47 = tpu.matmul %44, %46, %cst_24 {dimension_numbers = #tpu.dot_dimension_numbers<[1], [0], [0], [1], [0, 0, 1, 1], [], []>} : vector<32x4xbf16>, vector<4x128xbf16>, vector<32x128xf32> -> vector<32x128xf32>
    %48 = arith.addf %43, %47 : vector<32x128xf32>
    %cst_25 = arith.constant dense<0.000000e+00> : vector<128xf32>
    %49 = vector.multi_reduction <add>, %48, %cst_25 [0] : vector<32x128xf32> to vector<128xf32>
    %50 = vector.shape_cast %49 : vector<128xf32> to vector<1x128xf32>
    %cst_26 = arith.constant 3.125000e-02 : f32
    %51 = vector.broadcast %cst_26 : f32 to vector<1x128xf32>
    %52 = arith.mulf %50, %51 : vector<1x128xf32>
    %53 = vector.broadcast %52 : vector<1x128xf32> to vector<32x128xf32>
    %54 = arith.subf %48, %53 : vector<32x128xf32>
    %55 = arith.mulf %54, %54 : vector<32x128xf32>
    %cst_27 = arith.constant dense<0.000000e+00> : vector<128xf32>
    %56 = vector.multi_reduction <add>, %55, %cst_27 [0] : vector<32x128xf32> to vector<128xf32>
    %57 = vector.shape_cast %56 : vector<128xf32> to vector<1x128xf32>
    %cst_28 = arith.constant 3.125000e-02 : f32
    %58 = vector.broadcast %cst_28 : f32 to vector<1x128xf32>
    %59 = arith.mulf %57, %58 : vector<1x128xf32>
    %cst_29 = arith.constant 9.99999974E-6 : f32
    %60 = vector.broadcast %cst_29 : f32 to vector<1x128xf32>
    %61 = arith.addf %59, %60 : vector<1x128xf32>
    %62 = math.rsqrt %61 : vector<1x128xf32>
    %63 = vector.broadcast %62 : vector<1x128xf32> to vector<32x128xf32>
    %64 = arith.mulf %54, %63 : vector<32x128xf32>
    %c0_30 = arith.constant 0 : index
    %c0_31 = arith.constant 0 : index
    %65 = vector.load %arg2[%c0_30, %c0_31] : memref<1x128xf32, #tpu.memory_space<vmem>>, vector<1x128xf32>
    %66 = vector.broadcast %65 : vector<1x128xf32> to vector<32x128xf32>
    %67 = arith.mulf %64, %66 : vector<32x128xf32>
    %c0_32 = arith.constant 0 : index
    %c0_33 = arith.constant 0 : index
    %68 = vector.load %arg3[%c0_32, %c0_33] : memref<1x128xf32, #tpu.memory_space<vmem>>, vector<1x128xf32>
    %69 = vector.broadcast %68 : vector<1x128xf32> to vector<32x128xf32>
    %70 = arith.addf %67, %69 : vector<32x128xf32>
    %cst_34 = arith.constant 0.000000e+00 : f32
    %71 = vector.broadcast %cst_34 : f32 to vector<32x128xf32>
    %72 = arith.maximumf %70, %71 : vector<32x128xf32>
    %73 = vector.extract_strided_slice %72 {offsets = [4, 0], sizes = [2, 128], strides = [1, 1]} : vector<32x128xf32> to vector<2x128xf32>
    %74 = vector.extract_strided_slice %72 {offsets = [2, 0], sizes = [2, 128], strides = [1, 1]} : vector<32x128xf32> to vector<2x128xf32>
    %75 = vector.extract_strided_slice %72 {offsets = [28, 0], sizes = [2, 128], strides = [1, 1]} : vector<32x128xf32> to vector<2x128xf32>
    %76 = vector.extract_strided_slice %72 {offsets = [26, 0], sizes = [2, 128], strides = [1, 1]} : vector<32x128xf32> to vector<2x128xf32>
    %77 = tpu.concatenate %73, %74, %72, %75, %76 in 0 : vector<2x128xf32>, vector<2x128xf32>, vector<32x128xf32>, vector<2x128xf32>, vector<2x128xf32> -> vector<40x128xf32>
    %78 = arith.truncf %77 : vector<40x128xf32> to vector<40x128xbf16>
    %79 = vector.extract_strided_slice %78 {offsets = [0, 0], sizes = [32, 128], strides = [1, 1]} : vector<40x128xbf16> to vector<32x128xbf16>
    %c0_35 = arith.constant 0 : index
    %c0_36 = arith.constant 0 : index
    %c0_37 = arith.constant 0 : index
    %80 = vector.load %arg4[%c0_35, %c0_36, %c0_37] : memref<5x128x256xbf16, #tpu.memory_space<vmem>>, vector<1x128x256xbf16>
    %81 = vector.shape_cast %80 : vector<1x128x256xbf16> to vector<128x256xbf16>
    %cst_38 = arith.constant dense<0.000000e+00> : vector<32x256xf32>
    %82 = tpu.matmul %79, %81, %cst_38 {dimension_numbers = #tpu.dot_dimension_numbers<[1], [0], [0], [1], [0, 0, 1, 1], [], []>} : vector<32x128xbf16>, vector<128x256xbf16>, vector<32x256xf32> -> vector<32x256xf32>
    %83 = vector.extract_strided_slice %78 {offsets = [2, 0], sizes = [32, 128], strides = [1, 1]} : vector<40x128xbf16> to vector<32x128xbf16>
    %c1_39 = arith.constant 1 : index
    %c0_40 = arith.constant 0 : index
    %c0_41 = arith.constant 0 : index
    %84 = vector.load %arg4[%c1_39, %c0_40, %c0_41] : memref<5x128x256xbf16, #tpu.memory_space<vmem>>, vector<1x128x256xbf16>
    %85 = vector.shape_cast %84 : vector<1x128x256xbf16> to vector<128x256xbf16>
    %cst_42 = arith.constant dense<0.000000e+00> : vector<32x256xf32>
    %86 = tpu.matmul %83, %85, %cst_42 {dimension_numbers = #tpu.dot_dimension_numbers<[1], [0], [0], [1], [0, 0, 1, 1], [], []>} : vector<32x128xbf16>, vector<128x256xbf16>, vector<32x256xf32> -> vector<32x256xf32>
    %87 = arith.addf %82, %86 : vector<32x256xf32>
    %88 = vector.extract_strided_slice %78 {offsets = [4, 0], sizes = [32, 128], strides = [1, 1]} : vector<40x128xbf16> to vector<32x128xbf16>
    %c2_43 = arith.constant 2 : index
    %c0_44 = arith.constant 0 : index
    %c0_45 = arith.constant 0 : index
    %89 = vector.load %arg4[%c2_43, %c0_44, %c0_45] : memref<5x128x256xbf16, #tpu.memory_space<vmem>>, vector<1x128x256xbf16>
    %90 = vector.shape_cast %89 : vector<1x128x256xbf16> to vector<128x256xbf16>
    %cst_46 = arith.constant dense<0.000000e+00> : vector<32x256xf32>
    %91 = tpu.matmul %88, %90, %cst_46 {dimension_numbers = #tpu.dot_dimension_numbers<[1], [0], [0], [1], [0, 0, 1, 1], [], []>} : vector<32x128xbf16>, vector<128x256xbf16>, vector<32x256xf32> -> vector<32x256xf32>
    %92 = arith.addf %87, %91 : vector<32x256xf32>
    %93 = vector.extract_strided_slice %78 {offsets = [6, 0], sizes = [32, 128], strides = [1, 1]} : vector<40x128xbf16> to vector<32x128xbf16>
    %c3_47 = arith.constant 3 : index
    %c0_48 = arith.constant 0 : index
    %c0_49 = arith.constant 0 : index
    %94 = vector.load %arg4[%c3_47, %c0_48, %c0_49] : memref<5x128x256xbf16, #tpu.memory_space<vmem>>, vector<1x128x256xbf16>
    %95 = vector.shape_cast %94 : vector<1x128x256xbf16> to vector<128x256xbf16>
    %cst_50 = arith.constant dense<0.000000e+00> : vector<32x256xf32>
    %96 = tpu.matmul %93, %95, %cst_50 {dimension_numbers = #tpu.dot_dimension_numbers<[1], [0], [0], [1], [0, 0, 1, 1], [], []>} : vector<32x128xbf16>, vector<128x256xbf16>, vector<32x256xf32> -> vector<32x256xf32>
    %97 = arith.addf %92, %96 : vector<32x256xf32>
    %98 = vector.extract_strided_slice %78 {offsets = [8, 0], sizes = [32, 128], strides = [1, 1]} : vector<40x128xbf16> to vector<32x128xbf16>
    %c4_51 = arith.constant 4 : index
    %c0_52 = arith.constant 0 : index
    %c0_53 = arith.constant 0 : index
    %99 = vector.load %arg4[%c4_51, %c0_52, %c0_53] : memref<5x128x256xbf16, #tpu.memory_space<vmem>>, vector<1x128x256xbf16>
    %100 = vector.shape_cast %99 : vector<1x128x256xbf16> to vector<128x256xbf16>
    %cst_54 = arith.constant dense<0.000000e+00> : vector<32x256xf32>
    %101 = tpu.matmul %98, %100, %cst_54 {dimension_numbers = #tpu.dot_dimension_numbers<[1], [0], [0], [1], [0, 0, 1, 1], [], []>} : vector<32x128xbf16>, vector<128x256xbf16>, vector<32x256xf32> -> vector<32x256xf32>
    %102 = arith.addf %97, %101 : vector<32x256xf32>
    %cst_55 = arith.constant dense<0.000000e+00> : vector<256xf32>
    %103 = vector.multi_reduction <add>, %102, %cst_55 [0] : vector<32x256xf32> to vector<256xf32>
    %104 = vector.shape_cast %103 : vector<256xf32> to vector<1x256xf32>
    %cst_56 = arith.constant 3.125000e-02 : f32
    %105 = vector.broadcast %cst_56 : f32 to vector<1x256xf32>
    %106 = arith.mulf %104, %105 : vector<1x256xf32>
    %107 = vector.broadcast %106 : vector<1x256xf32> to vector<32x256xf32>
    %108 = arith.subf %102, %107 : vector<32x256xf32>
    %109 = arith.mulf %108, %108 : vector<32x256xf32>
    %cst_57 = arith.constant dense<0.000000e+00> : vector<256xf32>
    %110 = vector.multi_reduction <add>, %109, %cst_57 [0] : vector<32x256xf32> to vector<256xf32>
    %111 = vector.shape_cast %110 : vector<256xf32> to vector<1x256xf32>
    %cst_58 = arith.constant 3.125000e-02 : f32
    %112 = vector.broadcast %cst_58 : f32 to vector<1x256xf32>
    %113 = arith.mulf %111, %112 : vector<1x256xf32>
    %cst_59 = arith.constant 9.99999974E-6 : f32
    %114 = vector.broadcast %cst_59 : f32 to vector<1x256xf32>
    %115 = arith.addf %113, %114 : vector<1x256xf32>
    %116 = math.rsqrt %115 : vector<1x256xf32>
    %117 = vector.broadcast %116 : vector<1x256xf32> to vector<32x256xf32>
    %118 = arith.mulf %108, %117 : vector<32x256xf32>
    %c0_60 = arith.constant 0 : index
    %c0_61 = arith.constant 0 : index
    %119 = vector.load %arg5[%c0_60, %c0_61] : memref<1x256xf32, #tpu.memory_space<vmem>>, vector<1x256xf32>
    %120 = vector.broadcast %119 : vector<1x256xf32> to vector<32x256xf32>
    %121 = arith.mulf %118, %120 : vector<32x256xf32>
    %c0_62 = arith.constant 0 : index
    %c0_63 = arith.constant 0 : index
    %122 = vector.load %arg6[%c0_62, %c0_63] : memref<1x256xf32, #tpu.memory_space<vmem>>, vector<1x256xf32>
    %123 = vector.broadcast %122 : vector<1x256xf32> to vector<32x256xf32>
    %124 = arith.addf %121, %123 : vector<32x256xf32>
    %cst_64 = arith.constant 0.000000e+00 : f32
    %125 = vector.broadcast %cst_64 : f32 to vector<32x256xf32>
    %126 = arith.maximumf %124, %125 : vector<32x256xf32>
    %127 = vector.extract_strided_slice %126 {offsets = [2, 0], sizes = [2, 256], strides = [1, 1]} : vector<32x256xf32> to vector<2x256xf32>
    %128 = vector.extract_strided_slice %126 {offsets = [28, 0], sizes = [2, 256], strides = [1, 1]} : vector<32x256xf32> to vector<2x256xf32>
    %129 = tpu.concatenate %127, %126, %128 in 0 : vector<2x256xf32>, vector<32x256xf32>, vector<2x256xf32> -> vector<36x256xf32>
    %130 = arith.truncf %129 : vector<36x256xf32> to vector<36x256xbf16>
    %131 = vector.extract_strided_slice %130 {offsets = [0, 0], sizes = [32, 256], strides = [1, 1]} : vector<36x256xbf16> to vector<32x256xbf16>
    %c0_65 = arith.constant 0 : index
    %c0_66 = arith.constant 0 : index
    %c0_67 = arith.constant 0 : index
    %132 = vector.load %arg7[%c0_65, %c0_66, %c0_67] : memref<3x256x8xbf16, #tpu.memory_space<vmem>>, vector<1x256x8xbf16>
    %133 = vector.shape_cast %132 : vector<1x256x8xbf16> to vector<256x8xbf16>
    %cst_68 = arith.constant dense<0.000000e+00> : vector<32x8xf32>
    %134 = tpu.matmul %131, %133, %cst_68 {dimension_numbers = #tpu.dot_dimension_numbers<[1], [0], [0], [1], [0, 0, 1, 1], [], []>} : vector<32x256xbf16>, vector<256x8xbf16>, vector<32x8xf32> -> vector<32x8xf32>
    %135 = vector.extract_strided_slice %130 {offsets = [2, 0], sizes = [32, 256], strides = [1, 1]} : vector<36x256xbf16> to vector<32x256xbf16>
    %c1_69 = arith.constant 1 : index
    %c0_70 = arith.constant 0 : index
    %c0_71 = arith.constant 0 : index
    %136 = vector.load %arg7[%c1_69, %c0_70, %c0_71] : memref<3x256x8xbf16, #tpu.memory_space<vmem>>, vector<1x256x8xbf16>
    %137 = vector.shape_cast %136 : vector<1x256x8xbf16> to vector<256x8xbf16>
    %cst_72 = arith.constant dense<0.000000e+00> : vector<32x8xf32>
    %138 = tpu.matmul %135, %137, %cst_72 {dimension_numbers = #tpu.dot_dimension_numbers<[1], [0], [0], [1], [0, 0, 1, 1], [], []>} : vector<32x256xbf16>, vector<256x8xbf16>, vector<32x8xf32> -> vector<32x8xf32>
    %139 = arith.addf %134, %138 : vector<32x8xf32>
    %140 = vector.extract_strided_slice %130 {offsets = [4, 0], sizes = [32, 256], strides = [1, 1]} : vector<36x256xbf16> to vector<32x256xbf16>
    %c2_73 = arith.constant 2 : index
    %c0_74 = arith.constant 0 : index
    %c0_75 = arith.constant 0 : index
    %141 = vector.load %arg7[%c2_73, %c0_74, %c0_75] : memref<3x256x8xbf16, #tpu.memory_space<vmem>>, vector<1x256x8xbf16>
    %142 = vector.shape_cast %141 : vector<1x256x8xbf16> to vector<256x8xbf16>
    %cst_76 = arith.constant dense<0.000000e+00> : vector<32x8xf32>
    %143 = tpu.matmul %140, %142, %cst_76 {dimension_numbers = #tpu.dot_dimension_numbers<[1], [0], [0], [1], [0, 0, 1, 1], [], []>} : vector<32x256xbf16>, vector<256x8xbf16>, vector<32x8xf32> -> vector<32x8xf32>
    %144 = arith.addf %139, %143 : vector<32x8xf32>
    %cst_77 = arith.constant dense<0.000000e+00> : vector<8xf32>
    %145 = vector.multi_reduction <add>, %144, %cst_77 [0] : vector<32x8xf32> to vector<8xf32>
    %146 = vector.shape_cast %145 : vector<8xf32> to vector<1x8xf32>
    %cst_78 = arith.constant 3.125000e-02 : f32
    %147 = vector.broadcast %cst_78 : f32 to vector<1x8xf32>
    %148 = arith.mulf %146, %147 : vector<1x8xf32>
    %149 = vector.broadcast %148 : vector<1x8xf32> to vector<32x8xf32>
    %150 = arith.subf %144, %149 : vector<32x8xf32>
    %151 = arith.mulf %150, %150 : vector<32x8xf32>
    %cst_79 = arith.constant dense<0.000000e+00> : vector<8xf32>
    %152 = vector.multi_reduction <add>, %151, %cst_79 [0] : vector<32x8xf32> to vector<8xf32>
    %153 = vector.shape_cast %152 : vector<8xf32> to vector<1x8xf32>
    %cst_80 = arith.constant 3.125000e-02 : f32
    %154 = vector.broadcast %cst_80 : f32 to vector<1x8xf32>
    %155 = arith.mulf %153, %154 : vector<1x8xf32>
    %cst_81 = arith.constant 9.99999974E-6 : f32
    %156 = vector.broadcast %cst_81 : f32 to vector<1x8xf32>
    %157 = arith.addf %155, %156 : vector<1x8xf32>
    %158 = math.rsqrt %157 : vector<1x8xf32>
    %159 = vector.broadcast %158 : vector<1x8xf32> to vector<32x8xf32>
    %160 = arith.mulf %150, %159 : vector<32x8xf32>
    %c0_82 = arith.constant 0 : index
    %c0_83 = arith.constant 0 : index
    %161 = vector.load %arg8[%c0_82, %c0_83] : memref<1x8xf32, #tpu.memory_space<vmem>>, vector<1x8xf32>
    %162 = vector.broadcast %161 : vector<1x8xf32> to vector<32x8xf32>
    %163 = arith.mulf %160, %162 : vector<32x8xf32>
    %c0_84 = arith.constant 0 : index
    %c0_85 = arith.constant 0 : index
    %164 = vector.load %arg9[%c0_84, %c0_85] : memref<1x8xf32, #tpu.memory_space<vmem>>, vector<1x8xf32>
    %165 = vector.broadcast %164 : vector<1x8xf32> to vector<32x8xf32>
    %166 = arith.addf %163, %165 : vector<32x8xf32>
    %cst_86 = arith.constant 0.000000e+00 : f32
    %167 = vector.broadcast %cst_86 : f32 to vector<32x8xf32>
    %168 = arith.maximumf %166, %167 : vector<32x8xf32>
    %c0_87 = arith.constant 0 : index
    %c0_88 = arith.constant 0 : index
    %169 = vector.load %arg11[%c0_87, %c0_88] : memref<1x4xf32, #tpu.memory_space<vmem>>, vector<1x4xf32>
    %170 = vector.extract_strided_slice %168 {offsets = [0, 0], sizes = [2, 8], strides = [1, 1]} : vector<32x8xf32> to vector<2x8xf32>
    %171 = vector.extract_strided_slice %168 {offsets = [2, 0], sizes = [2, 8], strides = [1, 1]} : vector<32x8xf32> to vector<2x8xf32>
    %172 = arith.addf %170, %171 : vector<2x8xf32>
    %173 = vector.extract_strided_slice %168 {offsets = [4, 0], sizes = [2, 8], strides = [1, 1]} : vector<32x8xf32> to vector<2x8xf32>
    %174 = arith.addf %172, %173 : vector<2x8xf32>
    %175 = vector.extract_strided_slice %168 {offsets = [6, 0], sizes = [2, 8], strides = [1, 1]} : vector<32x8xf32> to vector<2x8xf32>
    %176 = arith.addf %174, %175 : vector<2x8xf32>
    %177 = vector.extract_strided_slice %168 {offsets = [8, 0], sizes = [2, 8], strides = [1, 1]} : vector<32x8xf32> to vector<2x8xf32>
    %178 = arith.addf %176, %177 : vector<2x8xf32>
    %179 = vector.extract_strided_slice %168 {offsets = [10, 0], sizes = [2, 8], strides = [1, 1]} : vector<32x8xf32> to vector<2x8xf32>
    %180 = arith.addf %178, %179 : vector<2x8xf32>
    %181 = vector.extract_strided_slice %168 {offsets = [12, 0], sizes = [2, 8], strides = [1, 1]} : vector<32x8xf32> to vector<2x8xf32>
    %182 = arith.addf %180, %181 : vector<2x8xf32>
    %183 = vector.extract_strided_slice %168 {offsets = [14, 0], sizes = [2, 8], strides = [1, 1]} : vector<32x8xf32> to vector<2x8xf32>
    %184 = arith.addf %182, %183 : vector<2x8xf32>
    %cst_89 = arith.constant 1.250000e-01 : f32
    %185 = vector.broadcast %cst_89 : f32 to vector<2x8xf32>
    %186 = arith.mulf %184, %185 : vector<2x8xf32>
    %c0_90 = arith.constant 0 : index
    %c0_91 = arith.constant 0 : index
    %c0_92 = arith.constant 0 : index
    %187 = vector.load %arg10[%c0_90, %c0_91, %c0_92] : memref<2x8x4xf32, #tpu.memory_space<vmem>>, vector<1x8x4xf32>
    %188 = vector.shape_cast %187 : vector<1x8x4xf32> to vector<8x4xf32>
    %cst_93 = arith.constant dense<0.000000e+00> : vector<2x4xf32>
    %189 = tpu.matmul %186, %188, %cst_93 {dimension_numbers = #tpu.dot_dimension_numbers<[1], [0], [0], [1], [0, 0, 1, 1], [], []>} : vector<2x8xf32>, vector<8x4xf32>, vector<2x4xf32> -> vector<2x4xf32>
    %190 = vector.broadcast %169 : vector<1x4xf32> to vector<2x4xf32>
    %191 = arith.addf %190, %189 : vector<2x4xf32>
    %192 = vector.extract_strided_slice %168 {offsets = [16, 0], sizes = [2, 8], strides = [1, 1]} : vector<32x8xf32> to vector<2x8xf32>
    %193 = vector.extract_strided_slice %168 {offsets = [18, 0], sizes = [2, 8], strides = [1, 1]} : vector<32x8xf32> to vector<2x8xf32>
    %194 = arith.addf %192, %193 : vector<2x8xf32>
    %195 = vector.extract_strided_slice %168 {offsets = [20, 0], sizes = [2, 8], strides = [1, 1]} : vector<32x8xf32> to vector<2x8xf32>
    %196 = arith.addf %194, %195 : vector<2x8xf32>
    %197 = vector.extract_strided_slice %168 {offsets = [22, 0], sizes = [2, 8], strides = [1, 1]} : vector<32x8xf32> to vector<2x8xf32>
    %198 = arith.addf %196, %197 : vector<2x8xf32>
    %199 = vector.extract_strided_slice %168 {offsets = [24, 0], sizes = [2, 8], strides = [1, 1]} : vector<32x8xf32> to vector<2x8xf32>
    %200 = arith.addf %198, %199 : vector<2x8xf32>
    %201 = vector.extract_strided_slice %168 {offsets = [26, 0], sizes = [2, 8], strides = [1, 1]} : vector<32x8xf32> to vector<2x8xf32>
    %202 = arith.addf %200, %201 : vector<2x8xf32>
    %203 = vector.extract_strided_slice %168 {offsets = [28, 0], sizes = [2, 8], strides = [1, 1]} : vector<32x8xf32> to vector<2x8xf32>
    %204 = arith.addf %202, %203 : vector<2x8xf32>
    %205 = vector.extract_strided_slice %168 {offsets = [30, 0], sizes = [2, 8], strides = [1, 1]} : vector<32x8xf32> to vector<2x8xf32>
    %206 = arith.addf %204, %205 : vector<2x8xf32>
    %cst_94 = arith.constant 1.250000e-01 : f32
    %207 = vector.broadcast %cst_94 : f32 to vector<2x8xf32>
    %208 = arith.mulf %206, %207 : vector<2x8xf32>
    %c1_95 = arith.constant 1 : index
    %c0_96 = arith.constant 0 : index
    %c0_97 = arith.constant 0 : index
    %209 = vector.load %arg10[%c1_95, %c0_96, %c0_97] : memref<2x8x4xf32, #tpu.memory_space<vmem>>, vector<1x8x4xf32>
    %210 = vector.shape_cast %209 : vector<1x8x4xf32> to vector<8x4xf32>
    %cst_98 = arith.constant dense<0.000000e+00> : vector<2x4xf32>
    %211 = tpu.matmul %208, %210, %cst_98 {dimension_numbers = #tpu.dot_dimension_numbers<[1], [0], [0], [1], [0, 0, 1, 1], [], []>} : vector<2x8xf32>, vector<8x4xf32>, vector<2x4xf32> -> vector<2x4xf32>
    %212 = arith.addf %191, %211 : vector<2x4xf32>
    %c0_99 = arith.constant 0 : index
    %c0_100 = arith.constant 0 : index
    %213 = vector.load %arg12[%c0_99, %c0_100] : memref<4x128xf32, #tpu.memory_space<vmem>>, vector<4x128xf32>
    %cst_101 = arith.constant dense<0.000000e+00> : vector<2x128xf32>
    %214 = tpu.matmul %212, %213, %cst_101 {dimension_numbers = #tpu.dot_dimension_numbers<[1], [0], [0], [1], [0, 0, 1, 1], [], []>} : vector<2x4xf32>, vector<4x128xf32>, vector<2x128xf32> -> vector<2x128xf32>
    %c0_102 = arith.constant 0 : index
    %c0_103 = arith.constant 0 : index
    %215 = vector.load %arg13[%c0_102, %c0_103] : memref<1x128xf32, #tpu.memory_space<vmem>>, vector<1x128xf32>
    %216 = vector.broadcast %215 : vector<1x128xf32> to vector<2x128xf32>
    %217 = arith.addf %214, %216 : vector<2x128xf32>
    %c0_104 = arith.constant 0 : index
    %c0_105 = arith.constant 0 : index
    %218 = vector.load %arg14[%c0_104, %c0_105] : memref<2x128xf32, #tpu.memory_space<vmem>>, vector<2x128xf32>
    tpu.vector_store %arg14[%c0_104, %c0_105], %217 {strides = array<i32>} : memref<2x128xf32, #tpu.memory_space<vmem>>, vector<2x128xf32>,
    return
  }
}

</mosaic_0001>

<llo_original>
// kernel: downstream_forward.1
$region0: #{downstream_forward.1}
  #allocation0 [shape = 'u32[]', space=smem, size = 0x4, offset = 0x4, fixed_abs, tag = 'smem constant byte address 0x4 - core index']
  #allocation1 [shape = 'u32[144,128]{1,0:T(1,128)}', space=vmem, size = 0x12000, scoped, tag = 'internal scratch']
  %s0 = inlined_call_operand.vmem [shape: f32[32,4], index: 0, kind: input, shape index: {}]
  %s1 = inlined_call_operand.vmem [shape: bf16[8,4,128], index: 1, kind: input, shape index: {}]
  %s2 = inlined_call_operand.vmem [shape: f32[1,128], index: 2, kind: input, shape index: {}]
  %s3 = inlined_call_operand.vmem [shape: f32[1,128], index: 3, kind: input, shape index: {}]
  %s4 = inlined_call_operand.hbm [shape: bf16[5,128,256], index: 4, kind: input, shape index: {}]
  %s5 = inlined_call_operand.vmem [shape: f32[1,256], index: 5, kind: input, shape index: {}]
  %s6 = inlined_call_operand.vmem [shape: f32[1,256], index: 6, kind: input, shape index: {}]
  %s7 = inlined_call_operand.vmem [shape: bf16[3,256,8], index: 7, kind: input, shape index: {}]
  %s8 = inlined_call_operand.vmem [shape: f32[1,8], index: 8, kind: input, shape index: {}]
  %s9 = inlined_call_operand.vmem [shape: f32[1,8], index: 9, kind: input, shape index: {}]
  %s10 = inlined_call_operand.vmem [shape: f32[2,8,4], index: 10, kind: input, shape index: {}]
  %s11 = inlined_call_operand.vmem [shape: f32[1,4], index: 11, kind: input, shape index: {}]
  %s12 = inlined_call_operand.vmem [shape: f32[4,128], index: 12, kind: input, shape index: {}]
  %s13 = inlined_call_operand.vmem [shape: f32[1,128], index: 13, kind: input, shape index: {}]
  %s14 = inlined_call_operand.hbm [shape: f32[2,128], index: 14, kind: output, shape index: {}]
  %s15 = sld [smem:[#allocation0]]
  $region70: #{downstream_forward.1} parent=0
    _
  %s17 = ssub.s32 1, %s15
  %s18 = scalar_select 0, %s17, %s15
  $region1: #{downstream_forward.1} parent=0
    #allocation2 [shape = 'u8[327680]{0}', space=vmem, size = 0x50000, scoped, tag = 'input window, operand 4, single buffered']
    #allocation3 [shape = 's32[1]{0}', space=sflag, size = 0x4, scoped, tag = 'scoped memory for downstream_forward.1']
    #allocation4 [shape = 's32[1]{0}', space=sflag, size = 0x4, scoped, tag = 'scoped memory for downstream_forward.1']
    #allocation5 [shape = 'u8[1024]{0}', space=vmem, size = 0x400, scoped, tag = 'output window, operand 0, single buffered']
    %19 = vsyncpa [#allocation3], 0
    %20 = vsyncpa [#allocation4], 0
    // Predicated region
    $region2: #{downstream_forward.1} parent=1 // pred_check
      _
    $region3: #{downstream_forward.1} parent=1 // pred_check_branch
      %22 = sbr.rel (0) target = $region5
    $region4: #{downstream_forward.1} parent=1 // pred_region
      _
    $region5: #{downstream_forward.1} parent=1 // pred_fallthru
      _
    // Predicated region
    $region6: #{downstream_forward.1} parent=1 // pred_check
      _
    $region7: #{downstream_forward.1} parent=1 // pred_check_branch
      %24 = sbr.rel (0) target = $region9
    $region8: #{downstream_forward.1} parent=1 // pred_region
      _
    $region9: #{downstream_forward.1} parent=1 // pred_fallthru
      _
    // Predicated region
    $region10: #{downstream_forward.1} parent=1 // pred_check
      _
    $region11: #{downstream_forward.1} parent=1 // pred_check_branch
      %26 = sbr.rel (0) target = $region13
    $region12: #{downstream_forward.1} parent=1 // pred_region
      _
    $region13: #{downstream_forward.1} parent=1 // pred_fallthru
      _
    // Predicated region
    $region14: #{downstream_forward.1} parent=1 // pred_check
      _
    $region15: #{downstream_forward.1} parent=1 // pred_check_branch
      %28 = sbr.rel (0) target = $region17
    $region16: #{downstream_forward.1} parent=1 // pred_region
      _
    $region17: #{downstream_forward.1} parent=1 // pred_fallthru
      _
    // Predicated region
    $region18: #{downstream_forward.1} parent=1 // pred_check
      _
    $region19: #{downstream_forward.1} parent=1 // pred_check_branch
      %30 = sbr.rel (0) target = $region21
    $region20: #{downstream_forward.1} parent=1 // pred_region
      %s32 = ssub.s32 10240, 10240
      %33 = vsyncadd [#allocation3], %s32
      %s34 = sshll.u32 [#allocation2], 4
      %s35 = int_to_ptr.vmem [resolvable:$true] %s34
      %40 = dma.hbm_to_vmem [thread:$0]  %s4, 10240, %s35, [#allocation3], 128, 128, 8
    $region21: #{downstream_forward.1} parent=1 // pred_fallthru
      _
    // Predicated region
    $region22: #{downstream_forward.1} parent=1 // pred_check
      _
    $region23: #{downstream_forward.1} parent=1 // pred_check_branch
      %42 = sbr.rel (0) target = $region25
    $region24: #{downstream_forward.1} parent=1 // pred_region
      _
    $region25: #{downstream_forward.1} parent=1 // pred_fallthru
      _
    // Predicated region
    $region26: #{downstream_forward.1} parent=1 // pred_check
      _
    $region27: #{downstream_forward.1} parent=1 // pred_check_branch
      %44 = sbr.rel (0) target = $region29
    $region28: #{downstream_forward.1} parent=1 // pred_region
      _
    $region29: #{downstream_forward.1} parent=1 // pred_fallthru
      _
    // Predicated region
    $region30: #{downstream_forward.1} parent=1 // pred_check
      _
    $region31: #{downstream_forward.1} parent=1 // pred_check_branch
      %46 = sbr.rel (0) target = $region33
    $region32: #{downstream_forward.1} parent=1 // pred_region
      _
    $region33: #{downstream_forward.1} parent=1 // pred_fallthru
      _
    // Predicated region
    $region34: #{downstream_forward.1} parent=1 // pred_check
      _
    $region35: #{downstream_forward.1} parent=1 // pred_check_branch
      %48 = sbr.rel (0) target = $region37
    $region36: #{downstream_forward.1} parent=1 // pred_region
      _
    $region37: #{downstream_forward.1} parent=1 // pred_fallthru
      _
    // Predicated region
    $region38: #{downstream_forward.1} parent=1 // pred_check
      _
    $region39: #{downstream_forward.1} parent=1 // pred_check_branch
      %50 = sbr.rel (0) target = $region41
    $region40: #{downstream_forward.1} parent=1 // pred_region
      _
    $region41: #{downstream_forward.1} parent=1 // pred_fallthru
      _
    // Predicated region
    $region42: #{downstream_forward.1} parent=1 // pred_check
      _
    $region43: #{downstream_forward.1} parent=1 // pred_check_branch
      %52 = sbr.rel (0) target = $region45
    $region44: #{downstream_forward.1} parent=1 // pred_region
      _
    $region45: #{downstream_forward.1} parent=1 // pred_fallthru
      _
    // Predicated region
    $region46: #{downstream_forward.1} parent=1 // pred_check
      _
    $region47: #{downstream_forward.1} parent=1 // pred_check_branch
      %54 = sbr.rel (0) target = $region49
    $region48: #{downstream_forward.1} parent=1 // pred_region
      _
    $region49: #{downstream_forward.1} parent=1 // pred_fallthru
      _
    // Predicated region
    $region50: #{downstream_forward.1} parent=1 // pred_check
      _
    $region51: #{downstream_forward.1} parent=1 // pred_check_branch
      %56 = sbr.rel (0) target = $region53
    $region52: #{downstream_forward.1} parent=1 // pred_region
      _
    $region53: #{downstream_forward.1} parent=1 // pred_fallthru
      _
    // Predicated region
    $region54: #{downstream_forward.1} parent=1 // pred_check
      _
    $region55: #{downstream_forward.1} parent=1 // pred_check_branch
      %58 = sbr.rel (0) target = $region57
    $region56: #{downstream_forward.1} parent=1 // pred_region
      _
    $region57: #{downstream_forward.1} parent=1 // pred_fallthru
      _
    // Predicated region
    $region58: #{downstream_forward.1} parent=1 // pred_check
      _
    $region59: #{downstream_forward.1} parent=1 // pred_check_branch
      %60 = sbr.rel (0) target = $region61
    $region60: #{downstream_forward.1} parent=1 // pred_region
      %61 = dma.done [#allocation3], 10240
    $region61: #{downstream_forward.1} parent=1 // pred_fallthru
      _
    %v63 = vld [vmem:[%s0] sm:$0xff]
    %v64 = vld [vmem:[%s0 + $0x8] sm:$0xff]
    %v65 = vld [vmem:[%s0 + $0x10] sm:$0xff]
    %v66 = vld [vmem:[%s0 + $0x18] sm:$0xff]
    %v68 = vrot.slane %v63, 6
    %v70 = vrot.slane %v63, 2
    %vm75 = vcmask 1045504
    %v76 = vrot.slane %v64, 2
    %v77 = vsel %vm75, %v70, %v76
    %v78 = vrot.slane %v65, 2
    %v79 = vsel %vm75, %v76, %v78
    %v80 = vrot.slane %v66, 2
    %v81 = vsel %vm75, %v78, %v80
    %v86 = vrot.slane %v66, 6
    %vm89 = vcmask 1041408
    %v90 = vsel %vm89, %v68, %v70
    %vm91 = vcmask 1043456
    %v92 = vsel %vm91, %v90, %v68
    %v93 = vsel %vm75, %v92, %v70
    %v94 = vsel %vm75, %v80, %v86
    %v95 = vsel %vm89, %v80, %v86
    %v96 = vsel %vm91, %v95, %v78
    %v97 = vpack.c.bf16 %v77, %v93
    %v98 = vpack.c.bf16 %v81, %v79
    %v99 = vpack.c.bf16 %v96, %v94
    %v100 = vld [vmem:[%s1] sm:$0x3]
    %s101 = scalar_lea.vmem %s1, 2
    %v102 = vld [vmem:[%s101] sm:$0x3]
    %vm106 = vcmask 1046528
    %v107 = vrot.slane %v97, 1
    %v108 = vrot.slane %v98, 1
    %v109 = vsel %vm106, %v107, %v108
    %v110 = vrot.slane %v99, 1
    %v111 = vsel %vm106, %v108, %v110
    %vm112 = vcmask 31744
    %v114 = vsel %vm112, %v109, 0
    %v117 = vsel %vm112, %v111, 0
    %v120 = vsel %vm89, %v102, 0
    %122 = vmatprep.subr.bf16.mxu0 0
    %123 = vmatpush1.bf16.msra.mxu0 %v120
    %124 = vmatprep.subr.bf16.mxu0 0
    %125 = vmatpush1.bf16.msra.mxu0 0
    %126 = vmatprep.subr.bf16.mxu0 0
    %127 = vmatpush1.bf16.msra.mxu0 0
    %128 = vmatprep.subr.bf16.mxu0 0
    %129 = vmatpush1.bf16.msra.mxu0 0
    %130 = vmatprep.subr.bf16.mxu0 0
    %131 = vmatpush1.bf16.msra.mxu0 0
    %132 = vmatprep.subr.bf16.mxu0 0
    %133 = vmatpush1.bf16.msra.mxu0 0
    %134 = vmatprep.subr.bf16.mxu0 0
    %135 = vmatpush1.bf16.msra.mxu0 0
    %136 = vmatprep.subr.bf16.mxu0 0
    %137 = vmatpush1.bf16.msra.mxu0 0
    %138 = vmatprep.subr.bf16.mxu0 0
    %139 = vmatpush1.bf16.msra.mxu0 0
    %140 = vmatprep.subr.bf16.mxu0 0
    %141 = vmatpush1.bf16.msra.mxu0 0
    %142 = vmatprep.subr.bf16.mxu0 0
    %143 = vmatpush1.bf16.msra.mxu0 0
    %144 = vmatprep.subr.bf16.mxu0 0
    %145 = vmatpush1.bf16.msra.mxu0 0
    %146 = vmatprep.subr.bf16.mxu0 0
    %147 = vmatpush1.bf16.msra.mxu0 0
    %148 = vmatprep.subr.bf16.mxu0 0
    %149 = vmatpush1.bf16.msra.mxu0 0
    %150 = vmatprep.subr.bf16.mxu0 0
    %151 = vmatpush1.bf16.msra.mxu0 0
    %152 = vmatprep.subr.bf16.mxu0 0
    %153 = vmatpush1.bf16.msra.mxu0 0
    %154 = vmatprep.mubr.bf16.mxu0 0
    %155 = vmatmul.mubr.bf16.gmra.mrb[0].mxu0 %v114
    %v156 = vpop.f32.mrb[0].mxu0
    %v157 = vadd.f32 0.0, %v156
    %v158 = vpop.f32.mrb[0].mxu0
    %v159 = vpop.f32.mrb[0].mxu0
    %v160 = vadd.f32 0.0, %v159
    %v161 = vpop.f32.mrb[0].mxu0
    %162 = vmatprep.mubr.bf16.mxu0 0
    %163 = vmatmul.mubr.bf16.gmra.mrb[0].mxu0 %v117
    %v164 = vpop.f32.mrb[0].mxu0
    %v165 = vadd.f32 0.0, %v164
    %v166 = vpop.f32.mrb[0].mxu0
    %v167 = vpop.f32.mrb[0].mxu0
    %v168 = vadd.f32 0.0, %v167
    %v169 = vpop.f32.mrb[0].mxu0
    %170 = vdwg.mxu0
    %v172 = vsel %vm112, %v97, 0
    %v175 = vsel %vm112, %v98, 0
    %v178 = vsel %vm89, %v100, 0
    %180 = vmatprep.subr.bf16.mxu0 0
    %181 = vmatpush1.bf16.msra.mxu0 %v178
    %182 = vmatprep.subr.bf16.mxu0 0
    %183 = vmatpush1.bf16.msra.mxu0 0
    %184 = vmatprep.subr.bf16.mxu0 0
    %185 = vmatpush1.bf16.msra.mxu0 0
    %186 = vmatprep.subr.bf16.mxu0 0
    %187 = vmatpush1.bf16.msra.mxu0 0
    %188 = vmatprep.subr.bf16.mxu0 0
    %189 = vmatpush1.bf16.msra.mxu0 0
    %190 = vmatprep.subr.bf16.mxu0 0
    %191 = vmatpush1.bf16.msra.mxu0 0
    %192 = vmatprep.subr.bf16.mxu0 0
    %193 = vmatpush1.bf16.msra.mxu0 0
    %194 = vmatprep.subr.bf16.mxu0 0
    %195 = vmatpush1.bf16.msra.mxu0 0
    %196 = vmatprep.subr.bf16.mxu0 0
    %197 = vmatpush1.bf16.msra.mxu0 0
    %198 = vmatprep.subr.bf16.mxu0 0
    %199 = vmatpush1.bf16.msra.mxu0 0
    %200 = vmatprep.subr.bf16.mxu0 0
    %201 = vmatpush1.bf16.msra.mxu0 0
    %202 = vmatprep.subr.bf16.mxu0 0
    %203 = vmatpush1.bf16.msra.mxu0 0
    %204 = vmatprep.subr.bf16.mxu0 0
    %205 = vmatpush1.bf16.msra.mxu0 0
    %206 = vmatprep.subr.bf16.mxu0 0
    %207 = vmatpush1.bf16.msra.mxu0 0
    %208 = vmatprep.subr.bf16.mxu0 0
    %209 = vmatpush1.bf16.msra.mxu0 0
    %210 = vmatprep.subr.bf16.mxu0 0
    %211 = vmatpush1.bf16.msra.mxu0 0
    %212 = vmatprep.mubr.bf16.mxu0 0
    %213 = vmatmul.mubr.bf16.gmra.mrb[0].mxu0 %v172
    %v214 = vpop.f32.mrb[0].mxu0
    %v215 = vadd.f32 %v157, %v214
    %v216 = vpop.f32.mrb[0].mxu0
    %v217 = vpop.f32.mrb[0].mxu0
    %v218 = vadd.f32 %v160, %v217
    %v219 = vpop.f32.mrb[0].mxu0
    %220 = vmatprep.mubr.bf16.mxu0 0
    %221 = vmatmul.mubr.bf16.gmra.mrb[0].mxu0 %v175
    %v222 = vpop.f32.mrb[0].mxu0
    %v223 = vadd.f32 %v165, %v222
    %v224 = vpop.f32.mrb[0].mxu0
    %v225 = vpop.f32.mrb[0].mxu0
    %v226 = vadd.f32 %v168, %v225
    %v227 = vpop.f32.mrb[0].mxu0
    %228 = vdwg.mxu0
    %s229 = scalar_lea.vmem %s1, 4
    %v230 = vld [vmem:[%s229] sm:$0x3]
    %vm231 = vcmask 1045504
    %v232 = vrot.slane %v97, 2
    %v233 = vrot.slane %v98, 2
    %v234 = vsel %vm231, %v232, %v233
    %v235 = vrot.slane %v99, 2
    %v236 = vsel %vm231, %v233, %v235
    %v238 = vsel %vm112, %v234, 0
    %v241 = vsel %vm112, %v236, 0
    %v244 = vsel %vm89, %v230, 0
    %246 = vmatprep.subr.bf16.mxu0 0
    %247 = vmatpush1.bf16.msra.mxu0 %v244
    %248 = vmatprep.subr.bf16.mxu0 0
    %249 = vmatpush1.bf16.msra.mxu0 0
    %250 = vmatprep.subr.bf16.mxu0 0
    %251 = vmatpush1.bf16.msra.mxu0 0
    %252 = vmatprep.subr.bf16.mxu0 0
    %253 = vmatpush1.bf16.msra.mxu0 0
    %254 = vmatprep.subr.bf16.mxu0 0
    %255 = vmatpush1.bf16.msra.mxu0 0
    %256 = vmatprep.subr.bf16.mxu0 0
    %257 = vmatpush1.bf16.msra.mxu0 0
    %258 = vmatprep.subr.bf16.mxu0 0
    %259 = vmatpush1.bf16.msra.mxu0 0
    %260 = vmatprep.subr.bf16.mxu0 0
    %261 = vmatpush1.bf16.msra.mxu0 0
    %262 = vmatprep.subr.bf16.mxu0 0
    %263 = vmatpush1.bf16.msra.mxu0 0
    %264 = vmatprep.subr.bf16.mxu0 0
    %265 = vmatpush1.bf16.msra.mxu0 0
    %266 = vmatprep.subr.bf16.mxu0 0
    %267 = vmatpush1.bf16.msra.mxu0 0
    %268 = vmatprep.subr.bf16.mxu0 0
    %269 = vmatpush1.bf16.msra.mxu0 0
    %270 = vmatprep.subr.bf16.mxu0 0
    %271 = vmatpush1.bf16.msra.mxu0 0
    %272 = vmatprep.subr.bf16.mxu0 0
    %273 = vmatpush1.bf16.msra.mxu0 0
    %274 = vmatprep.subr.bf16.mxu0 0
    %275 = vmatpush1.bf16.msra.mxu0 0
    %276 = vmatprep.subr.bf16.mxu0 0
    %277 = vmatpush1.bf16.msra.mxu0 0
    %278 = vmatprep.mubr.bf16.mxu0 0
    %279 = vmatmul.mubr.bf16.gmra.mrb[0].mxu0 %v238
    %v280 = vpop.f32.mrb[0].mxu0
    %v281 = vadd.f32 0.0, %v280
    %v282 = vpop.f32.mrb[0].mxu0
    %v283 = vpop.f32.mrb[0].mxu0
    %v284 = vadd.f32 0.0, %v283
    %v285 = vpop.f32.mrb[0].mxu0
    %286 = vmatprep.mubr.bf16.mxu0 0
    %287 = vmatmul.mubr.bf16.gmra.mrb[0].mxu0 %v241
    %v288 = vpop.f32.mrb[0].mxu0
    %v289 = vadd.f32 0.0, %v288
    %v290 = vpop.f32.mrb[0].mxu0
    %v291 = vpop.f32.mrb[0].mxu0
    %v292 = vadd.f32 0.0, %v291
    %v293 = vpop.f32.mrb[0].mxu0
    %294 = vdwg.mxu0
    %v295 = vadd.f32 %v215, %v281
    %v296 = vadd.f32 %v218, %v284
    %v297 = vadd.f32 %v223, %v289
    %v298 = vadd.f32 %v226, %v292
    %s299 = scalar_lea.vmem %s1, 6
    %v300 = vld [vmem:[%s299] sm:$0x3]
    %vm301 = vcmask 1044480
    %v302 = vrot.slane %v97, 3
    %v303 = vrot.slane %v98, 3
    %v304 = vsel %vm301, %v302, %v303
    %v305 = vrot.slane %v99, 3
    %v306 = vsel %vm301, %v303, %v305
    %v308 = vsel %vm112, %v304, 0
    %v311 = vsel %vm112, %v306, 0
    %v314 = vsel %vm89, %v300, 0
    %316 = vmatprep.subr.bf16.mxu0 0
    %317 = vmatpush1.bf16.msra.mxu0 %v314
    %318 = vmatprep.subr.bf16.mxu0 0
    %319 = vmatpush1.bf16.msra.mxu0 0
    %320 = vmatprep.subr.bf16.mxu0 0
    %321 = vmatpush1.bf16.msra.mxu0 0
    %322 = vmatprep.subr.bf16.mxu0 0
    %323 = vmatpush1.bf16.msra.mxu0 0
    %324 = vmatprep.subr.bf16.mxu0 0
    %325 = vmatpush1.bf16.msra.mxu0 0
    %326 = vmatprep.subr.bf16.mxu0 0
    %327 = vmatpush1.bf16.msra.mxu0 0
    %328 = vmatprep.subr.bf16.mxu0 0
    %329 = vmatpush1.bf16.msra.mxu0 0
    %330 = vmatprep.subr.bf16.mxu0 0
    %331 = vmatpush1.bf16.msra.mxu0 0
    %332 = vmatprep.subr.bf16.mxu0 0
    %333 = vmatpush1.bf16.msra.mxu0 0
    %334 = vmatprep.subr.bf16.mxu0 0
    %335 = vmatpush1.bf16.msra.mxu0 0
    %336 = vmatprep.subr.bf16.mxu0 0
    %337 = vmatpush1.bf16.msra.mxu0 0
    %338 = vmatprep.subr.bf16.mxu0 0
    %339 = vmatpush1.bf16.msra.mxu0 0
    %340 = vmatprep.subr.bf16.mxu0 0
    %341 = vmatpush1.bf16.msra.mxu0 0
    %342 = vmatprep.subr.bf16.mxu0 0
    %343 = vmatpush1.bf16.msra.mxu0 0
    %344 = vmatprep.subr.bf16.mxu0 0
    %345 = vmatpush1.bf16.msra.mxu0 0
    %346 = vmatprep.subr.bf16.mxu0 0
    %347 = vmatpush1.bf16.msra.mxu0 0
    %348 = vmatprep.mubr.bf16.mxu0 0
    %349 = vmatmul.mubr.bf16.gmra.mrb[0].mxu0 %v308
    %v350 = vpop.f32.mrb[0].mxu0
    %v351 = vadd.f32 0.0, %v350
    %v352 = vpop.f32.mrb[0].mxu0
    %v353 = vpop.f32.mrb[0].mxu0
    %v354 = vadd.f32 0.0, %v353
    %v355 = vpop.f32.mrb[0].mxu0
    %356 = vmatprep.mubr.bf16.mxu0 0
    %357 = vmatmul.mubr.bf16.gmra.mrb[0].mxu0 %v311
    %v358 = vpop.f32.mrb[0].mxu0
    %v359 = vadd.f32 0.0, %v358
    %v360 = vpop.f32.mrb[0].mxu0
    %v361 = vpop.f32.mrb[0].mxu0
    %v362 = vadd.f32 0.0, %v361
    %v363 = vpop.f32.mrb[0].mxu0
    %364 = vdwg.mxu0
    %v365 = vadd.f32 %v295, %v351
    %v366 = vadd.f32 %v296, %v354
    %v367 = vadd.f32 %v297, %v359
    %v368 = vadd.f32 %v298, %v362
    %s369 = scalar_lea.vmem %s1, 8
    %v370 = vld [vmem:[%s369] sm:$0x3]
    %vm371 = vcmask 1043456
    %v372 = vrot.slane %v97, 4
    %v373 = vrot.slane %v98, 4
    %v374 = vsel %vm371, %v372, %v373
    %v375 = vrot.slane %v99, 4
    %v376 = vsel %vm371, %v373, %v375
    %v378 = vsel %vm112, %v374, 0
    %v381 = vsel %vm112, %v376, 0
    %v384 = vsel %vm89, %v370, 0
    %386 = vmatprep.subr.bf16.mxu0 0
    %387 = vmatpush1.bf16.msra.mxu0 %v384
    %388 = vmatprep.subr.bf16.mxu0 0
    %389 = vmatpush1.bf16.msra.mxu0 0
    %390 = vmatprep.subr.bf16.mxu0 0
    %391 = vmatpush1.bf16.msra.mxu0 0
    %392 = vmatprep.subr.bf16.mxu0 0
    %393 = vmatpush1.bf16.msra.mxu0 0
    %394 = vmatprep.subr.bf16.mxu0 0
    %395 = vmatpush1.bf16.msra.mxu0 0
    %396 = vmatprep.subr.bf16.mxu0 0
    %397 = vmatpush1.bf16.msra.mxu0 0
    %398 = vmatprep.subr.bf16.mxu0 0
    %399 = vmatpush1.bf16.msra.mxu0 0
    %400 = vmatprep.subr.bf16.mxu0 0
    %401 = vmatpush1.bf16.msra.mxu0 0
    %402 = vmatprep.subr.bf16.mxu0 0
    %403 = vmatpush1.bf16.msra.mxu0 0
    %404 = vmatprep.subr.bf16.mxu0 0
    %405 = vmatpush1.bf16.msra.mxu0 0
    %406 = vmatprep.subr.bf16.mxu0 0
    %407 = vmatpush1.bf16.msra.mxu0 0
    %408 = vmatprep.subr.bf16.mxu0 0
    %409 = vmatpush1.bf16.msra.mxu0 0
    %410 = vmatprep.subr.bf16.mxu0 0
    %411 = vmatpush1.bf16.msra.mxu0 0
    %412 = vmatprep.subr.bf16.mxu0 0
    %413 = vmatpush1.bf16.msra.mxu0 0
    %414 = vmatprep.subr.bf16.mxu0 0
    %415 = vmatpush1.bf16.msra.mxu0 0
    %416 = vmatprep.subr.bf16.mxu0 0
    %417 = vmatpush1.bf16.msra.mxu0 0
    %418 = vmatprep.mubr.bf16.mxu0 0
    %419 = vmatmul.mubr.bf16.gmra.mrb[0].mxu0 %v378
    %v420 = vpop.f32.mrb[0].mxu0
    %v421 = vadd.f32 0.0, %v420
    %v422 = vpop.f32.mrb[0].mxu0
    %v423 = vpop.f32.mrb[0].mxu0
    %v424 = vadd.f32 0.0, %v423
    %v425 = vpop.f32.mrb[0].mxu0
    %426 = vmatprep.mubr.bf16.mxu0 0
    %427 = vmatmul.mubr.bf16.gmra.mrb[0].mxu0 %v381
    %v428 = vpop.f32.mrb[0].mxu0
    %v429 = vadd.f32 0.0, %v428
    %v430 = vpop.f32.mrb[0].mxu0
    %v431 = vpop.f32.mrb[0].mxu0
    %v432 = vadd.f32 0.0, %v431
    %v433 = vpop.f32.mrb[0].mxu0
    %434 = vdwg.mxu0
    %v435 = vadd.f32 %v365, %v421
    %v436 = vadd.f32 %v366, %v424
    %v437 = vadd.f32 %v367, %v429
    %v438 = vadd.f32 %v368, %v432
    %s439 = scalar_lea.vmem %s1, 10
    %v440 = vld [vmem:[%s439] sm:$0x3]
    %vm441 = vcmask 1042432
    %v442 = vrot.slane %v97, 5
    %v443 = vrot.slane %v98, 5
    %v444 = vsel %vm441, %v442, %v443
    %v445 = vrot.slane %v99, 5
    %v446 = vsel %vm441, %v443, %v445
    %v448 = vsel %vm112, %v444, 0
    %v451 = vsel %vm112, %v446, 0
    %v454 = vsel %vm89, %v440, 0
    %456 = vmatprep.subr.bf16.mxu0 0
    %457 = vmatpush1.bf16.msra.mxu0 %v454
    %458 = vmatprep.subr.bf16.mxu0 0
    %459 = vmatpush1.bf16.msra.mxu0 0
    %460 = vmatprep.subr.bf16.mxu0 0
    %461 = vmatpush1.bf16.msra.mxu0 0
    %462 = vmatprep.subr.bf16.mxu0 0
    %463 = vmatpush1.bf16.msra.mxu0 0
    %464 = vmatprep.subr.bf16.mxu0 0
    %465 = vmatpush1.bf16.msra.mxu0 0
    %466 = vmatprep.subr.bf16.mxu0 0
    %467 = vmatpush1.bf16.msra.mxu0 0
    %468 = vmatprep.subr.bf16.mxu0 0
    %469 = vmatpush1.bf16.msra.mxu0 0
    %470 = vmatprep.subr.bf16.mxu0 0
    %471 = vmatpush1.bf16.msra.mxu0 0
    %472 = vmatprep.subr.bf16.mxu0 0
    %473 = vmatpush1.bf16.msra.mxu0 0
    %474 = vmatprep.subr.bf16.mxu0 0
    %475 = vmatpush1.bf16.msra.mxu0 0
    %476 = vmatprep.subr.bf16.mxu0 0
    %477 = vmatpush1.bf16.msra.mxu0 0
    %478 = vmatprep.subr.bf16.mxu0 0
    %479 = vmatpush1.bf16.msra.mxu0 0
    %480 = vmatprep.subr.bf16.mxu0 0
    %481 = vmatpush1.bf16.msra.mxu0 0
    %482 = vmatprep.subr.bf16.mxu0 0
    %483 = vmatpush1.bf16.msra.mxu0 0
    %484 = vmatprep.subr.bf16.mxu0 0
    %485 = vmatpush1.bf16.msra.mxu0 0
    %486 = vmatprep.subr.bf16.mxu0 0
    %487 = vmatpush1.bf16.msra.mxu0 0
    %488 = vmatprep.mubr.bf16.mxu0 0
    %489 = vmatmul.mubr.bf16.gmra.mrb[0].mxu0 %v448
    %v490 = vpop.f32.mrb[0].mxu0
    %v491 = vadd.f32 0.0, %v490
    %v492 = vpop.f32.mrb[0].mxu0
    %v493 = vpop.f32.mrb[0].mxu0
    %v494 = vadd.f32 0.0, %v493
    %v495 = vpop.f32.mrb[0].mxu0
    %496 = vmatprep.mubr.bf16.mxu0 0
    %497 = vmatmul.mubr.bf16.gmra.mrb[0].mxu0 %v451
    %v498 = vpop.f32.mrb[0].mxu0
    %v499 = vadd.f32 0.0, %v498
    %v500 = vpop.f32.mrb[0].mxu0
    %v501 = vpop.f32.mrb[0].mxu0
    %v502 = vadd.f32 0.0, %v501
    %v503 = vpop.f32.mrb[0].mxu0
    %504 = vdwg.mxu0
    %v505 = vadd.f32 %v435, %v491
    %v506 = vadd.f32 %v436, %v494
    %v507 = vadd.f32 %v437, %v499
    %v508 = vadd.f32 %v438, %v502
    %s509 = scalar_lea.vmem %s1, 12
    %v510 = vld [vmem:[%s509] sm:$0x3]
    %vm511 = vcmask 1041408
    %v512 = vrot.slane %v97, 6
    %v513 = vrot.slane %v98, 6
    %v514 = vsel %vm511, %v512, %v513
    %v515 = vrot.slane %v99, 6
    %v516 = vsel %vm511, %v513, %v515
    %v518 = vsel %vm112, %v514, 0
    %v521 = vsel %vm112, %v516, 0
    %v524 = vsel %vm89, %v510, 0
    %526 = vmatprep.subr.bf16.mxu0 0
    %527 = vmatpush1.bf16.msra.mxu0 %v524
    %528 = vmatprep.subr.bf16.mxu0 0
    %529 = vmatpush1.bf16.msra.mxu0 0
    %530 = vmatprep.subr.bf16.mxu0 0
    %531 = vmatpush1.bf16.msra.mxu0 0
    %532 = vmatprep.subr.bf16.mxu0 0
    %533 = vmatpush1.bf16.msra.mxu0 0
    %534 = vmatprep.subr.bf16.mxu0 0
    %535 = vmatpush1.bf16.msra.mxu0 0
    %536 = vmatprep.subr.bf16.mxu0 0
    %537 = vmatpush1.bf16.msra.mxu0 0
    %538 = vmatprep.subr.bf16.mxu0 0
    %539 = vmatpush1.bf16.msra.mxu0 0
    %540 = vmatprep.subr.bf16.mxu0 0
    %541 = vmatpush1.bf16.msra.mxu0 0
    %542 = vmatprep.subr.bf16.mxu0 0
    %543 = vmatpush1.bf16.msra.mxu0 0
    %544 = vmatprep.subr.bf16.mxu0 0
    %545 = vmatpush1.bf16.msra.mxu0 0
    %546 = vmatprep.subr.bf16.mxu0 0
    %547 = vmatpush1.bf16.msra.mxu0 0
    %548 = vmatprep.subr.bf16.mxu0 0
    %549 = vmatpush1.bf16.msra.mxu0 0
    %550 = vmatprep.subr.bf16.mxu0 0
    %551 = vmatpush1.bf16.msra.mxu0 0
    %552 = vmatprep.subr.bf16.mxu0 0
    %553 = vmatpush1.bf16.msra.mxu0 0
    %554 = vmatprep.subr.bf16.mxu0 0
    %555 = vmatpush1.bf16.msra.mxu0 0
    %556 = vmatprep.subr.bf16.mxu0 0
    %557 = vmatpush1.bf16.msra.mxu0 0
    %558 = vmatprep.mubr.bf16.mxu0 0
    %559 = vmatmul.mubr.bf16.gmra.mrb[0].mxu0 %v518
    %v560 = vpop.f32.mrb[0].mxu0
    %v561 = vadd.f32 0.0, %v560
    %v562 = vpop.f32.mrb[0].mxu0
    %v563 = vpop.f32.mrb[0].mxu0
    %v564 = vadd.f32 0.0, %v563
    %v565 = vpop.f32.mrb[0].mxu0
    %566 = vmatprep.mubr.bf16.mxu0 0
    %567 = vmatmul.mubr.bf16.gmra.mrb[0].mxu0 %v521
    %v568 = vpop.f32.mrb[0].mxu0
    %v569 = vadd.f32 0.0, %v568
    %v570 = vpop.f32.mrb[0].mxu0
    %v571 = vpop.f32.mrb[0].mxu0
    %v572 = vadd.f32 0.0, %v571
    %v573 = vpop.f32.mrb[0].mxu0
    %574 = vdwg.mxu0
    %v575 = vadd.f32 %v505, %v561
    %v576 = vadd.f32 %v506, %v564
    %v577 = vadd.f32 %v507, %v569
    %v578 = vadd.f32 %v508, %v572
    %s579 = scalar_lea.vmem %s1, 14
    %v580 = vld [vmem:[%s579] sm:$0x3]
    %vm581 = vcmask 1040384
    %v582 = vrot.slane %v97, 7
    %v583 = vrot.slane %v98, 7
    %v584 = vsel %vm581, %v582, %v583
    %v585 = vrot.slane %v99, 7
    %v586 = vsel %vm581, %v583, %v585
    %v588 = vsel %vm112, %v584, 0
    %v591 = vsel %vm112, %v586, 0
    %v594 = vsel %vm89, %v580, 0
    %596 = vmatprep.subr.bf16.mxu0 0
    %597 = vmatpush1.bf16.msra.mxu0 %v594
    %598 = vmatprep.subr.bf16.mxu0 0
    %599 = vmatpush1.bf16.msra.mxu0 0
    %600 = vmatprep.subr.bf16.mxu0 0
    %601 = vmatpush1.bf16.msra.mxu0 0
    %602 = vmatprep.subr.bf16.mxu0 0
    %603 = vmatpush1.bf16.msra.mxu0 0
    %604 = vmatprep.subr.bf16.mxu0 0
    %605 = vmatpush1.bf16.msra.mxu0 0
    %606 = vmatprep.subr.bf16.mxu0 0
    %607 = vmatpush1.bf16.msra.mxu0 0
    %608 = vmatprep.subr.bf16.mxu0 0
    %609 = vmatpush1.bf16.msra.mxu0 0
    %610 = vmatprep.subr.bf16.mxu0 0
    %611 = vmatpush1.bf16.msra.mxu0 0
    %612 = vmatprep.subr.bf16.mxu0 0
    %613 = vmatpush1.bf16.msra.mxu0 0
    %614 = vmatprep.subr.bf16.mxu0 0
    %615 = vmatpush1.bf16.msra.mxu0 0
    %616 = vmatprep.subr.bf16.mxu0 0
    %617 = vmatpush1.bf16.msra.mxu0 0
    %618 = vmatprep.subr.bf16.mxu0 0
    %619 = vmatpush1.bf16.msra.mxu0 0
    %620 = vmatprep.subr.bf16.mxu0 0
    %621 = vmatpush1.bf16.msra.mxu0 0
    %622 = vmatprep.subr.bf16.mxu0 0
    %623 = vmatpush1.bf16.msra.mxu0 0
    %624 = vmatprep.subr.bf16.mxu0 0
    %625 = vmatpush1.bf16.msra.mxu0 0
    %626 = vmatprep.subr.bf16.mxu0 0
    %627 = vmatpush1.bf16.msra.mxu0 0
    %628 = vmatprep.mubr.bf16.mxu0 0
    %629 = vmatmul.mubr.bf16.gmra.mrb[0].mxu0 %v588
    %v630 = vpop.f32.mrb[0].mxu0
    %v631 = vadd.f32 0.0, %v630
    %v632 = vpop.f32.mrb[0].mxu0
    %v633 = vpop.f32.mrb[0].mxu0
    %v634 = vadd.f32 0.0, %v633
    %v635 = vpop.f32.mrb[0].mxu0
    %636 = vmatprep.mubr.bf16.mxu0 0
    %637 = vmatmul.mubr.bf16.gmra.mrb[0].mxu0 %v591
    %v638 = vpop.f32.mrb[0].mxu0
    %v639 = vadd.f32 0.0, %v638
    %v640 = vpop.f32.mrb[0].mxu0
    %v641 = vpop.f32.mrb[0].mxu0
    %v642 = vadd.f32 0.0, %v641
    %v643 = vpop.f32.mrb[0].mxu0
    %644 = vdwg.mxu0
    %v645 = vadd.f32 %v575, %v631
    %v646 = vadd.f32 %v576, %v634
    %v647 = vadd.f32 %v577, %v639
    %v648 = vadd.f32 %v578, %v642
    %v649 = vadd.f32 %v645, %v646
    %v650 = vadd.f32 %v649, %v647
    %v651 = vadd.f32 %v650, %v648
    %v652 = vrot.slane %v651, 4
    %v653 = vadd.f32 %v651, %v652
    %v654 = vrot.slane %v653, 2
    %v655 = vadd.f32 %v653, %v654
    %v656 = vrot.slane %v655, 1
    %v657 = vadd.f32 %v655, %v656
    %v658 = vmul.f32 %v657, 0.03125
    %v659 = vsub.f32 %v645, %v658
    %v660 = vsub.f32 %v646, %v658
    %v661 = vsub.f32 %v647, %v658
    %v662 = vsub.f32 %v648, %v658
    %v663 = vmul.f32 %v659, %v659
    %v664 = vmul.f32 %v660, %v660
    %v665 = vmul.f32 %v661, %v661
    %v666 = vmul.f32 %v662, %v662
    %v667 = vadd.f32 %v663, %v664
    %v668 = vadd.f32 %v667, %v665
    %v669 = vadd.f32 %v668, %v666
    %v670 = vrot.slane %v669, 4
    %v671 = vadd.f32 %v669, %v670
    %v672 = vrot.slane %v671, 2
    %v673 = vadd.f32 %v671, %v672
    %v674 = vrot.slane %v673, 1
    %v675 = vadd.f32 %v673, %v674
    %v676 = vmul.f32 %v675, 0.03125
    %v677 = vadd.f32 %v676, 1e-05
    %v678 = vrsqrt.pop %v677
    %v679 = vmul.f32 %v659, %v678
    %v680 = vmul.f32 %v660, %v678
    %v681 = vmul.f32 %v661, %v678
    %v682 = vmul.f32 %v662, %v678
    %v683 = vld [vmem:[%s2] sm:$0x1]
    %v685 = vlaneseq
    %v686 = vshrl.u32 %v685, 7
    %v687 = vsub.s32 0, %v686
    %v688 = vrot.slane %v683, %v687
    %v690 = vmul.f32 %v679, %v688
    %v691 = vmul.f32 %v680, %v688
    %v692 = vmul.f32 %v681, %v688
    %v693 = vmul.f32 %v682, %v688
    %v694 = vld [vmem:[%s3] sm:$0x1]
    %v696 = vlaneseq
    %v697 = vshrl.u32 %v696, 7
    %v698 = vsub.s32 0, %v697
    %v699 = vrot.slane %v694, %v698
    %v701 = vadd.f32 %v690, %v699
    %v702 = vadd.f32 %v691, %v699
    %v703 = vadd.f32 %v692, %v699
    %v704 = vadd.f32 %v693, %v699
    %v705 = vmax.f32 %v701, 0.0
    %v706 = vmax.f32 %v702, 0.0
    %v707 = vmax.f32 %v703, 0.0
    %v708 = vmax.f32 %v704, 0.0
    %v710 = vrot.slane %v705, 4
    %v715 = vrot.slane %v706, 4
    %v716 = vsel %vm91, %v710, %v715
    %v717 = vrot.slane %v707, 4
    %v718 = vsel %vm91, %v715, %v717
    %v719 = vrot.slane %v708, 4
    %v720 = vsel %vm91, %v717, %v719
    %v725 = vsel %vm89, %v710, %v705
    %v726 = vsel %vm91, %v725, %v710
    %v727 = vsel %vm91, %v719, %v708
    %v728 = vsel %vm75, %v727, %v719
    %v729 = vpack.c.bf16 %v716, %v726
    %v730 = vpack.c.bf16 %v720, %v718
    %v731 = vpack.c.bf16 %v728, %v728
    %v732 = vld [vmem:[#allocation2] sm:$0xff]
    %v733 = vld [vmem:[#allocation2 + $0x8] sm:$0xff]
    %v734 = vld [vmem:[#allocation2 + $0x10] sm:$0xff]
    %v735 = vld [vmem:[#allocation2 + $0x18] sm:$0xff]
    %v736 = vld [vmem:[#allocation2 + $0x20] sm:$0xff]
    %v737 = vld [vmem:[#allocation2 + $0x28] sm:$0xff]
    %v738 = vld [vmem:[#allocation2 + $0x30] sm:$0xff]
    %v739 = vld [vmem:[#allocation2 + $0x38] sm:$0xff]
    %v740 = vld [vmem:[#allocation2 + $0x40] sm:$0xff]
    %v741 = vld [vmem:[#allocation2 + $0x48] sm:$0xff]
    %v742 = vld [vmem:[#allocation2 + $0x50] sm:$0xff]
    %v743 = vld [vmem:[#allocation2 + $0x58] sm:$0xff]
    %v744 = vld [vmem:[#allocation2 + $0x60] sm:$0xff]
    %v745 = vld [vmem:[#allocation2 + $0x68] sm:$0xff]
    %v746 = vld [vmem:[#allocation2 + $0x70] sm:$0xff]
    %v747 = vld [vmem:[#allocation2 + $0x78] sm:$0xff]
    %s748 = scalar_lea.vmem [#allocation2], 128
    %v749 = vld [vmem:[%s748] sm:$0xff]
    %v750 = vld [vmem:[%s748 + $0x8] sm:$0xff]
    %v751 = vld [vmem:[%s748 + $0x10] sm:$0xff]
    %v752 = vld [vmem:[%s748 + $0x18] sm:$0xff]
    %v753 = vld [vmem:[%s748 + $0x20] sm:$0xff]
    %v754 = vld [vmem:[%s748 + $0x28] sm:$0xff]
    %v755 = vld [vmem:[%s748 + $0x30] sm:$0xff]
    %v756 = vld [vmem:[%s748 + $0x38] sm:$0xff]
    %v757 = vld [vmem:[%s748 + $0x40] sm:$0xff]
    %v758 = vld [vmem:[%s748 + $0x48] sm:$0xff]
    %v759 = vld [vmem:[%s748 + $0x50] sm:$0xff]
    %v760 = vld [vmem:[%s748 + $0x58] sm:$0xff]
    %v761 = vld [vmem:[%s748 + $0x60] sm:$0xff]
    %v762 = vld [vmem:[%s748 + $0x68] sm:$0xff]
    %v763 = vld [vmem:[%s748 + $0x70] sm:$0xff]
    %v764 = vld [vmem:[%s748 + $0x78] sm:$0xff]
    %v768 = vrot.slane %v729, 1
    %v769 = vrot.slane %v730, 1
    %v770 = vsel %vm106, %v768, %v769
    %v771 = vrot.slane %v731, 1
    %v772 = vsel %vm106, %v769, %v771
    %v791 = vunpack.c.l.b16 %v749
    %v792 = vunpack.c.h.b16 %v749
    %v793 = vunpack.c.l.b16 %v750
    %v794 = vunpack.c.h.b16 %v750
    %v795 = vunpack.c.l.b16 %v751
    %v796 = vunpack.c.h.b16 %v751
    %v797 = vunpack.c.l.b16 %v752
    %v798 = vunpack.c.h.b16 %v752
    %v799 = vunpack.c.l.b16 %v753
    %v800 = vunpack.c.h.b16 %v753
    %v801 = vunpack.c.l.b16 %v754
    %v802 = vunpack.c.h.b16 %v754
    %v803 = vunpack.c.l.b16 %v755
    %v804 = vunpack.c.h.b16 %v755
    %v805 = vunpack.c.l.b16 %v756
    %v806 = vunpack.c.h.b16 %v756
    %v807 = vunpack.c.l.b16 %v757
    %v808 = vunpack.c.h.b16 %v757
    %v809 = vunpack.c.l.b16 %v758
    %v810 = vunpack.c.h.b16 %v758
    %v811 = vunpack.c.l.b16 %v759
    %v812 = vunpack.c.h.b16 %v759
    %v813 = vunpack.c.l.b16 %v760
    %v814 = vunpack.c.h.b16 %v760
    %v815 = vunpack.c.l.b16 %v761
    %v816 = vunpack.c.h.b16 %v761
    %v817 = vunpack.c.l.b16 %v762
    %v818 = vunpack.c.h.b16 %v762
    %v819 = vunpack.c.l.b16 %v763
    %v820 = vunpack.c.h.b16 %v763
    %v821 = vunpack.c.l.b16 %v764
    %v822 = vunpack.c.h.b16 %v764
    %v823 = vpack.c.b16 %v793, %v791
    %v824 = vpack.c.b16 %v794, %v792
    %v825 = vpack.c.b16 %v797, %v795
    %v826 = vpack.c.b16 %v798, %v796
    %v827 = vpack.c.b16 %v801, %v799
    %v828 = vpack.c.b16 %v802, %v800
    %v829 = vpack.c.b16 %v805, %v803
    %v830 = vpack.c.b16 %v806, %v804
    %v831 = vpack.c.b16 %v809, %v807
    %v832 = vpack.c.b16 %v810, %v808
    %v833 = vpack.c.b16 %v813, %v811
    %v834 = vpack.c.b16 %v814, %v812
    %v835 = vpack.c.b16 %v817, %v815
    %v836 = vpack.c.b16 %v818, %v816
    %v837 = vpack.c.b16 %v821, %v819
    %v838 = vpack.c.b16 %v822, %v820
    %855 = vmatprep.subr.bf16.mxu0 %v824
    %856 = vmatpush1.bf16.msra.mxu0 %v823
    %857 = vmatprep.subr.bf16.mxu0 %v826
    %858 = vmatpush1.bf16.msra.mxu0 %v825
    %859 = vmatprep.subr.bf16.mxu0 %v828
    %860 = vmatpush1.bf16.msra.mxu0 %v827
    %861 = vmatprep.subr.bf16.mxu0 %v830
    %862 = vmatpush1.bf16.msra.mxu0 %v829
    %863 = vmatprep.subr.bf16.mxu0 %v832
    %864 = vmatpush1.bf16.msra.mxu0 %v831
    %865 = vmatprep.subr.bf16.mxu0 %v834
    %866 = vmatpush1.bf16.msra.mxu0 %v833
    %867 = vmatprep.subr.bf16.mxu0 %v836
    %868 = vmatpush1.bf16.msra.mxu0 %v835
    %869 = vmatprep.subr.bf16.mxu0 %v838
    %870 = vmatpush1.bf16.msra.mxu0 %v837
    %871 = vmatprep.subr.bf16.mxu0 0
    %872 = vmatpush1.bf16.msra.mxu0 0
    %873 = vmatprep.subr.bf16.mxu0 0
    %874 = vmatpush1.bf16.msra.mxu0 0
    %875 = vmatprep.subr.bf16.mxu0 0
    %876 = vmatpush1.bf16.msra.mxu0 0
    %877 = vmatprep.subr.bf16.mxu0 0
    %878 = vmatpush1.bf16.msra.mxu0 0
    %879 = vmatprep.subr.bf16.mxu0 0
    %880 = vmatpush1.bf16.msra.mxu0 0
    %881 = vmatprep.subr.bf16.mxu0 0
    %882 = vmatpush1.bf16.msra.mxu0 0
    %883 = vmatprep.subr.bf16.mxu0 0
    %884 = vmatpush1.bf16.msra.mxu0 0
    %885 = vmatprep.subr.bf16.mxu0 0
    %886 = vmatpush1.bf16.msra.mxu0 0
    %887 = vmatprep.mubr.bf16.mxu0 0
    %888 = vmatmul.mubr.bf16.gmra.mrb[0].mxu0 %v770
    %v889 = vpop.f32.mrb[0].mxu0
    %v890 = vadd.f32 0.0, %v889
    %v891 = vpop.f32.mrb[0].mxu0
    %v892 = vadd.f32 0.0, %v891
    %v893 = vpop.f32.mrb[0].mxu0
    %v894 = vadd.f32 0.0, %v893
    %v895 = vpop.f32.mrb[0].mxu0
    %v896 = vadd.f32 0.0, %v895
    %897 = vmatprep.mubr.bf16.mxu0 0
    %898 = vmatmul.mubr.bf16.gmra.mrb[0].mxu0 %v772
    %v899 = vpop.f32.mrb[0].mxu0
    %v900 = vadd.f32 0.0, %v899
    %v901 = vpop.f32.mrb[0].mxu0
    %v902 = vadd.f32 0.0, %v901
    %v903 = vpop.f32.mrb[0].mxu0
    %v904 = vadd.f32 0.0, %v903
    %v905 = vpop.f32.mrb[0].mxu0
    %v906 = vadd.f32 0.0, %v905
    %907 = vdwg.mxu0
    %v924 = vunpack.c.l.b16 %v732
    %v925 = vunpack.c.h.b16 %v732
    %v926 = vunpack.c.l.b16 %v733
    %v927 = vunpack.c.h.b16 %v733
    %v928 = vunpack.c.l.b16 %v734
    %v929 = vunpack.c.h.b16 %v734
    %v930 = vunpack.c.l.b16 %v735
    %v931 = vunpack.c.h.b16 %v735
    %v932 = vunpack.c.l.b16 %v736
    %v933 = vunpack.c.h.b16 %v736
    %v934 = vunpack.c.l.b16 %v737
    %v935 = vunpack.c.h.b16 %v737
    %v936 = vunpack.c.l.b16 %v738
    %v937 = vunpack.c.h.b16 %v738
    %v938 = vunpack.c.l.b16 %v739
    %v939 = vunpack.c.h.b16 %v739
    %v940 = vunpack.c.l.b16 %v740
    %v941 = vunpack.c.h.b16 %v740
    %v942 = vunpack.c.l.b16 %v741
    %v943 = vunpack.c.h.b16 %v741
    %v944 = vunpack.c.l.b16 %v742
    %v945 = vunpack.c.h.b16 %v742
    %v946 = vunpack.c.l.b16 %v743
    %v947 = vunpack.c.h.b16 %v743
    %v948 = vunpack.c.l.b16 %v744
    %v949 = vunpack.c.h.b16 %v744
    %v950 = vunpack.c.l.b16 %v745
    %v951 = vunpack.c.h.b16 %v745
    %v952 = vunpack.c.l.b16 %v746
    %v953 = vunpack.c.h.b16 %v746
    %v954 = vunpack.c.l.b16 %v747
    %v955 = vunpack.c.h.b16 %v747
    %v956 = vpack.c.b16 %v926, %v924
    %v957 = vpack.c.b16 %v927, %v925
    %v958 = vpack.c.b16 %v930, %v928
    %v959 = vpack.c.b16 %v931, %v929
    %v960 = vpack.c.b16 %v934, %v932
    %v961 = vpack.c.b16 %v935, %v933
    %v962 = vpack.c.b16 %v938, %v936
    %v963 = vpack.c.b16 %v939, %v937
    %v964 = vpack.c.b16 %v942, %v940
    %v965 = vpack.c.b16 %v943, %v941
    %v966 = vpack.c.b16 %v946, %v944
    %v967 = vpack.c.b16 %v947, %v945
    %v968 = vpack.c.b16 %v950, %v948
    %v969 = vpack.c.b16 %v951, %v949
    %v970 = vpack.c.b16 %v954, %v952
    %v971 = vpack.c.b16 %v955, %v953
    %988 = vmatprep.subr.bf16.mxu0 %v957
    %989 = vmatpush1.bf16.msra.mxu0 %v956
    %990 = vmatprep.subr.bf16.mxu0 %v959
    %991 = vmatpush1.bf16.msra.mxu0 %v958
    %992 = vmatprep.subr.bf16.mxu0 %v961
    %993 = vmatpush1.bf16.msra.mxu0 %v960
    %994 = vmatprep.subr.bf16.mxu0 %v963
    %995 = vmatpush1.bf16.msra.mxu0 %v962
    %996 = vmatprep.subr.bf16.mxu0 %v965
    %997 = vmatpush1.bf16.msra.mxu0 %v964
    %998 = vmatprep.subr.bf16.mxu0 %v967
    %999 = vmatpush1.bf16.msra.mxu0 %v966
    %1000 = vmatprep.subr.bf16.mxu0 %v969
    %1001 = vmatpush1.bf16.msra.mxu0 %v968
    %1002 = vmatprep.subr.bf16.mxu0 %v971
    %1003 = vmatpush1.bf16.msra.mxu0 %v970
    %1004 = vmatprep.subr.bf16.mxu0 0
    %1005 = vmatpush1.bf16.msra.mxu0 0
    %1006 = vmatprep.subr.bf16.mxu0 0
    %1007 = vmatpush1.bf16.msra.mxu0 0
    %1008 = vmatprep.subr.bf16.mxu0 0
    %1009 = vmatpush1.bf16.msra.mxu0 0
    %1010 = vmatprep.subr.bf16.mxu0 0
    %1011 = vmatpush1.bf16.msra.mxu0 0
    %1012 = vmatprep.subr.bf16.mxu0 0
    %1013 = vmatpush1.bf16.msra.mxu0 0
    %1014 = vmatprep.subr.bf16.mxu0 0
    %1015 = vmatpush1.bf16.msra.mxu0 0
    %1016 = vmatprep.subr.bf16.mxu0 0
    %1017 = vmatpush1.bf16.msra.mxu0 0
    %1018 = vmatprep.subr.bf16.mxu0 0
    %1019 = vmatpush1.bf16.msra.mxu0 0
    %1020 = vmatprep.mubr.bf16.mxu0 0
    %1021 = vmatmul.mubr.bf16.gmra.mrb[0].mxu0 %v729
    %v1022 = vpop.f32.mrb[0].mxu0
    %v1023 = vadd.f32 %v890, %v1022
    %v1024 = vpop.f32.mrb[0].mxu0
    %v1025 = vadd.f32 %v892, %v1024
    %v1026 = vpop.f32.mrb[0].mxu0
    %v1027 = vadd.f32 %v894, %v1026
    %v1028 = vpop.f32.mrb[0].mxu0
    %v1029 = vadd.f32 %v896, %v1028
    %1030 = vmatprep.mubr.bf16.mxu0 0
    %1031 = vmatmul.mubr.bf16.gmra.mrb[0].mxu0 %v730
    %v1032 = vpop.f32.mrb[0].mxu0
    %v1033 = vadd.f32 %v900, %v1032
    %v1034 = vpop.f32.mrb[0].mxu0
    %v1035 = vadd.f32 %v902, %v1034
    %v1036 = vpop.f32.mrb[0].mxu0
    %v1037 = vadd.f32 %v904, %v1036
    %v1038 = vpop.f32.mrb[0].mxu0
    %v1039 = vadd.f32 %v906, %v1038
    %1040 = vdwg.mxu0
    %s1041 = scalar_lea.vmem [#allocation2], 256
    %v1042 = vld [vmem:[%s1041] sm:$0xff]
    %v1043 = vld [vmem:[%s1041 + $0x8] sm:$0xff]
    %v1044 = vld [vmem:[%s1041 + $0x10] sm:$0xff]
    %v1045 = vld [vmem:[%s1041 + $0x18] sm:$0xff]
    %v1046 = vld [vmem:[%s1041 + $0x20] sm:$0xff]
    %v1047 = vld [vmem:[%s1041 + $0x28] sm:$0xff]
    %v1048 = vld [vmem:[%s1041 + $0x30] sm:$0xff]
    %v1049 = vld [vmem:[%s1041 + $0x38] sm:$0xff]
    %v1050 = vld [vmem:[%s1041 + $0x40] sm:$0xff]
    %v1051 = vld [vmem:[%s1041 + $0x48] sm:$0xff]
    %v1052 = vld [vmem:[%s1041 + $0x50] sm:$0xff]
    %v1053 = vld [vmem:[%s1041 + $0x58] sm:$0xff]
    %v1054 = vld [vmem:[%s1041 + $0x60] sm:$0xff]
    %v1055 = vld [vmem:[%s1041 + $0x68] sm:$0xff]
    %v1056 = vld [vmem:[%s1041 + $0x70] sm:$0xff]
    %v1057 = vld [vmem:[%s1041 + $0x78] sm:$0xff]
    %v1058 = vrot.slane %v729, 2
    %v1059 = vrot.slane %v730, 2
    %v1060 = vsel %vm231, %v1058, %v1059
    %v1061 = vrot.slane %v731, 2
    %v1062 = vsel %vm231, %v1059, %v1061
    %v1081 = vunpack.c.l.b16 %v1042
    %v1082 = vunpack.c.h.b16 %v1042
    %v1083 = vunpack.c.l.b16 %v1043
    %v1084 = vunpack.c.h.b16 %v1043
    %v1085 = vunpack.c.l.b16 %v1044
    %v1086 = vunpack.c.h.b16 %v1044
    %v1087 = vunpack.c.l.b16 %v1045
    %v1088 = vunpack.c.h.b16 %v1045
    %v1089 = vunpack.c.l.b16 %v1046
    %v1090 = vunpack.c.h.b16 %v1046
    %v1091 = vunpack.c.l.b16 %v1047
    %v1092 = vunpack.c.h.b16 %v1047
    %v1093 = vunpack.c.l.b16 %v1048
    %v1094 = vunpack.c.h.b16 %v1048
    %v1095 = vunpack.c.l.b16 %v1049
    %v1096 = vunpack.c.h.b16 %v1049
    %v1097 = vunpack.c.l.b16 %v1050
    %v1098 = vunpack.c.h.b16 %v1050
    %v1099 = vunpack.c.l.b16 %v1051
    %v1100 = vunpack.c.h.b16 %v1051
    %v1101 = vunpack.c.l.b16 %v1052
    %v1102 = vunpack.c.h.b16 %v1052
    %v1103 = vunpack.c.l.b16 %v1053
    %v1104 = vunpack.c.h.b16 %v1053
    %v1105 = vunpack.c.l.b16 %v1054
    %v1106 = vunpack.c.h.b16 %v1054
    %v1107 = vunpack.c.l.b16 %v1055
    %v1108 = vunpack.c.h.b16 %v1055
    %v1109 = vunpack.c.l.b16 %v1056
    %v1110 = vunpack.c.h.b16 %v1056
    %v1111 = vunpack.c.l.b16 %v1057
    %v1112 = vunpack.c.h.b16 %v1057
    %v1113 = vpack.c.b16 %v1083, %v1081
    %v1114 = vpack.c.b16 %v1084, %v1082
    %v1115 = vpack.c.b16 %v1087, %v1085
    %v1116 = vpack.c.b16 %v1088, %v1086
    %v1117 = vpack.c.b16 %v1091, %v1089
    %v1118 = vpack.c.b16 %v1092, %v1090
    %v1119 = vpack.c.b16 %v1095, %v1093
    %v1120 = vpack.c.b16 %v1096, %v1094
    %v1121 = vpack.c.b16 %v1099, %v1097
    %v1122 = vpack.c.b16 %v1100, %v1098
    %v1123 = vpack.c.b16 %v1103, %v1101
    %v1124 = vpack.c.b16 %v1104, %v1102
    %v1125 = vpack.c.b16 %v1107, %v1105
    %v1126 = vpack.c.b16 %v1108, %v1106
    %v1127 = vpack.c.b16 %v1111, %v1109
    %v1128 = vpack.c.b16 %v1112, %v1110
    %1145 = vmatprep.subr.bf16.mxu0 %v1114
    %1146 = vmatpush1.bf16.msra.mxu0 %v1113
    %1147 = vmatprep.subr.bf16.mxu0 %v1116
    %1148 = vmatpush1.bf16.msra.mxu0 %v1115
    %1149 = vmatprep.subr.bf16.mxu0 %v1118
    %1150 = vmatpush1.bf16.msra.mxu0 %v1117
    %1151 = vmatprep.subr.bf16.mxu0 %v1120
    %1152 = vmatpush1.bf16.msra.mxu0 %v1119
    %1153 = vmatprep.subr.bf16.mxu0 %v1122
    %1154 = vmatpush1.bf16.msra.mxu0 %v1121
    %1155 = vmatprep.subr.bf16.mxu0 %v1124
    %1156 = vmatpush1.bf16.msra.mxu0 %v1123
    %1157 = vmatprep.subr.bf16.mxu0 %v1126
    %1158 = vmatpush1.bf16.msra.mxu0 %v1125
    %1159 = vmatprep.subr.bf16.mxu0 %v1128
    %1160 = vmatpush1.bf16.msra.mxu0 %v1127
    %1161 = vmatprep.subr.bf16.mxu0 0
    %1162 = vmatpush1.bf16.msra.mxu0 0
    %1163 = vmatprep.subr.bf16.mxu0 0
    %1164 = vmatpush1.bf16.msra.mxu0 0
    %1165 = vmatprep.subr.bf16.mxu0 0
    %1166 = vmatpush1.bf16.msra.mxu0 0
    %1167 = vmatprep.subr.bf16.mxu0 0
    %1168 = vmatpush1.bf16.msra.mxu0 0
    %1169 = vmatprep.subr.bf16.mxu0 0
    %1170 = vmatpush1.bf16.msra.mxu0 0
    %1171 = vmatprep.subr.bf16.mxu0 0
    %1172 = vmatpush1.bf16.msra.mxu0 0
    %1173 = vmatprep.subr.bf16.mxu0 0
    %1174 = vmatpush1.bf16.msra.mxu0 0
    %1175 = vmatprep.subr.bf16.mxu0 0
    %1176 = vmatpush1.bf16.msra.mxu0 0
    %1177 = vmatprep.mubr.bf16.mxu0 0
    %1178 = vmatmul.mubr.bf16.gmra.mrb[0].mxu0 %v1060
    %v1179 = vpop.f32.mrb[0].mxu0
    %v1180 = vadd.f32 0.0, %v1179
    %v1181 = vpop.f32.mrb[0].mxu0
    %v1182 = vadd.f32 0.0, %v1181
    %v1183 = vpop.f32.mrb[0].mxu0
    %v1184 = vadd.f32 0.0, %v1183
    %v1185 = vpop.f32.mrb[0].mxu0
    %v1186 = vadd.f32 0.0, %v1185
    %1187 = vmatprep.mubr.bf16.mxu0 0
    %1188 = vmatmul.mubr.bf16.gmra.mrb[0].mxu0 %v1062
    %v1189 = vpop.f32.mrb[0].mxu0
    %v1190 = vadd.f32 0.0, %v1189
    %v1191 = vpop.f32.mrb[0].mxu0
    %v1192 = vadd.f32 0.0, %v1191
    %v1193 = vpop.f32.mrb[0].mxu0
    %v1194 = vadd.f32 0.0, %v1193
    %v1195 = vpop.f32.mrb[0].mxu0
    %v1196 = vadd.f32 0.0, %v1195
    %1197 = vdwg.mxu0
    %v1198 = vadd.f32 %v1023, %v1180
    %v1199 = vadd.f32 %v1025, %v1182
    %v1200 = vadd.f32 %v1027, %v1184
    %v1201 = vadd.f32 %v1029, %v1186
    %v1202 = vadd.f32 %v1033, %v1190
    %v1203 = vadd.f32 %v1035, %v1192
    %v1204 = vadd.f32 %v1037, %v1194
    %v1205 = vadd.f32 %v1039, %v1196
    %s1206 = scalar_lea.vmem [#allocation2], 384
    %v1207 = vld [vmem:[%s1206] sm:$0xff]
    %v1208 = vld [vmem:[%s1206 + $0x8] sm:$0xff]
    %v1209 = vld [vmem:[%s1206 + $0x10] sm:$0xff]
    %v1210 = vld [vmem:[%s1206 + $0x18] sm:$0xff]
    %v1211 = vld [vmem:[%s1206 + $0x20] sm:$0xff]
    %v1212 = vld [vmem:[%s1206 + $0x28] sm:$0xff]
    %v1213 = vld [vmem:[%s1206 + $0x30] sm:$0xff]
    %v1214 = vld [vmem:[%s1206 + $0x38] sm:$0xff]
    %v1215 = vld [vmem:[%s1206 + $0x40] sm:$0xff]
    %v1216 = vld [vmem:[%s1206 + $0x48] sm:$0xff]
    %v1217 = vld [vmem:[%s1206 + $0x50] sm:$0xff]
    %v1218 = vld [vmem:[%s1206 + $0x58] sm:$0xff]
    %v1219 = vld [vmem:[%s1206 + $0x60] sm:$0xff]
    %v1220 = vld [vmem:[%s1206 + $0x68] sm:$0xff]
    %v1221 = vld [vmem:[%s1206 + $0x70] sm:$0xff]
    %v1222 = vld [vmem:[%s1206 + $0x78] sm:$0xff]
    %v1223 = vrot.slane %v729, 3
    %v1224 = vrot.slane %v730, 3
    %v1225 = vsel %vm301, %v1223, %v1224
    %v1226 = vrot.slane %v731, 3
    %v1227 = vsel %vm301, %v1224, %v1226
    %v1246 = vunpack.c.l.b16 %v1207
    %v1247 = vunpack.c.h.b16 %v1207
    %v1248 = vunpack.c.l.b16 %v1208
    %v1249 = vunpack.c.h.b16 %v1208
    %v1250 = vunpack.c.l.b16 %v1209
    %v1251 = vunpack.c.h.b16 %v1209
    %v1252 = vunpack.c.l.b16 %v1210
    %v1253 = vunpack.c.h.b16 %v1210
    %v1254 = vunpack.c.l.b16 %v1211
    %v1255 = vunpack.c.h.b16 %v1211
    %v1256 = vunpack.c.l.b16 %v1212
    %v1257 = vunpack.c.h.b16 %v1212
    %v1258 = vunpack.c.l.b16 %v1213
    %v1259 = vunpack.c.h.b16 %v1213
    %v1260 = vunpack.c.l.b16 %v1214
    %v1261 = vunpack.c.h.b16 %v1214
    %v1262 = vunpack.c.l.b16 %v1215
    %v1263 = vunpack.c.h.b16 %v1215
    %v1264 = vunpack.c.l.b16 %v1216
    %v1265 = vunpack.c.h.b16 %v1216
    %v1266 = vunpack.c.l.b16 %v1217
    %v1267 = vunpack.c.h.b16 %v1217
    %v1268 = vunpack.c.l.b16 %v1218
    %v1269 = vunpack.c.h.b16 %v1218
    %v1270 = vunpack.c.l.b16 %v1219
    %v1271 = vunpack.c.h.b16 %v1219
    %v1272 = vunpack.c.l.b16 %v1220
    %v1273 = vunpack.c.h.b16 %v1220
    %v1274 = vunpack.c.l.b16 %v1221
    %v1275 = vunpack.c.h.b16 %v1221
    %v1276 = vunpack.c.l.b16 %v1222
    %v1277 = vunpack.c.h.b16 %v1222
    %v1278 = vpack.c.b16 %v1248, %v1246
    %v1279 = vpack.c.b16 %v1249, %v1247
    %v1280 = vpack.c.b16 %v1252, %v1250
    %v1281 = vpack.c.b16 %v1253, %v1251
    %v1282 = vpack.c.b16 %v1256, %v1254
    %v1283 = vpack.c.b16 %v1257, %v1255
    %v1284 = vpack.c.b16 %v1260, %v1258
    %v1285 = vpack.c.b16 %v1261, %v1259
    %v1286 = vpack.c.b16 %v1264, %v1262
    %v1287 = vpack.c.b16 %v1265, %v1263
    %v1288 = vpack.c.b16 %v1268, %v1266
    %v1289 = vpack.c.b16 %v1269, %v1267
    %v1290 = vpack.c.b16 %v1272, %v1270
    %v1291 = vpack.c.b16 %v1273, %v1271
    %v1292 = vpack.c.b16 %v1276, %v1274
    %v1293 = vpack.c.b16 %v1277, %v1275
    %1310 = vmatprep.subr.bf16.mxu0 %v1279
    %1311 = vmatpush1.bf16.msra.mxu0 %v1278
    %1312 = vmatprep.subr.bf16.mxu0 %v1281
    %1313 = vmatpush1.bf16.msra.mxu0 %v1280
    %1314 = vmatprep.subr.bf16.mxu0 %v1283
    %1315 = vmatpush1.bf16.msra.mxu0 %v1282
    %1316 = vmatprep.subr.bf16.mxu0 %v1285
    %1317 = vmatpush1.bf16.msra.mxu0 %v1284
    %1318 = vmatprep.subr.bf16.mxu0 %v1287
    %1319 = vmatpush1.bf16.msra.mxu0 %v1286
    %1320 = vmatprep.subr.bf16.mxu0 %v1289
    %1321 = vmatpush1.bf16.msra.mxu0 %v1288
    %1322 = vmatprep.subr.bf16.mxu0 %v1291
    %1323 = vmatpush1.bf16.msra.mxu0 %v1290
    %1324 = vmatprep.subr.bf16.mxu0 %v1293
    %1325 = vmatpush1.bf16.msra.mxu0 %v1292
    %1326 = vmatprep.subr.bf16.mxu0 0
    %1327 = vmatpush1.bf16.msra.mxu0 0
    %1328 = vmatprep.subr.bf16.mxu0 0
    %1329 = vmatpush1.bf16.msra.mxu0 0
    %1330 = vmatprep.subr.bf16.mxu0 0
    %1331 = vmatpush1.bf16.msra.mxu0 0
    %1332 = vmatprep.subr.bf16.mxu0 0
    %1333 = vmatpush1.bf16.msra.mxu0 0
    %1334 = vmatprep.subr.bf16.mxu0 0
    %1335 = vmatpush1.bf16.msra.mxu0 0
    %1336 = vmatprep.subr.bf16.mxu0 0
    %1337 = vmatpush1.bf16.msra.mxu0 0
    %1338 = vmatprep.subr.bf16.mxu0 0
    %1339 = vmatpush1.bf16.msra.mxu0 0
    %1340 = vmatprep.subr.bf16.mxu0 0
    %1341 = vmatpush1.bf16.msra.mxu0 0
    %1342 = vmatprep.mubr.bf16.mxu0 0
    %1343 = vmatmul.mubr.bf16.gmra.mrb[0].mxu0 %v1225
    %v1344 = vpop.f32.mrb[0].mxu0
    %v1345 = vadd.f32 0.0, %v1344
    %v1346 = vpop.f32.mrb[0].mxu0
    %v1347 = vadd.f32 0.0, %v1346
    %v1348 = vpop.f32.mrb[0].mxu0
    %v1349 = vadd.f32 0.0, %v1348
    %v1350 = vpop.f32.mrb[0].mxu0
    %v1351 = vadd.f32 0.0, %v1350
    %1352 = vmatprep.mubr.bf16.mxu0 0
    %1353 = vmatmul.mubr.bf16.gmra.mrb[0].mxu0 %v1227
    %v1354 = vpop.f32.mrb[0].mxu0
    %v1355 = vadd.f32 0.0, %v1354
    %v1356 = vpop.f32.mrb[0].mxu0
    %v1357 = vadd.f32 0.0, %v1356
    %v1358 = vpop.f32.mrb[0].mxu0
    %v1359 = vadd.f32 0.0, %v1358
    %v1360 = vpop.f32.mrb[0].mxu0
    %v1361 = vadd.f32 0.0, %v1360
    %1362 = vdwg.mxu0
    %v1363 = vadd.f32 %v1198, %v1345
    %v1364 = vadd.f32 %v1199, %v1347
    %v1365 = vadd.f32 %v1200, %v1349
    %v1366 = vadd.f32 %v1201, %v1351
    %v1367 = vadd.f32 %v1202, %v1355
    %v1368 = vadd.f32 %v1203, %v1357
    %v1369 = vadd.f32 %v1204, %v1359
    %v1370 = vadd.f32 %v1205, %v1361
    %s1371 = scalar_lea.vmem [#allocation2], 512
    %v1372 = vld [vmem:[%s1371] sm:$0xff]
    %v1373 = vld [vmem:[%s1371 + $0x8] sm:$0xff]
    %v1374 = vld [vmem:[%s1371 + $0x10] sm:$0xff]
    %v1375 = vld [vmem:[%s1371 + $0x18] sm:$0xff]
    %v1376 = vld [vmem:[%s1371 + $0x20] sm:$0xff]
    %v1377 = vld [vmem:[%s1371 + $0x28] sm:$0xff]
    %v1378 = vld [vmem:[%s1371 + $0x30] sm:$0xff]
    %v1379 = vld [vmem:[%s1371 + $0x38] sm:$0xff]
    %v1380 = vld [vmem:[%s1371 + $0x40] sm:$0xff]
    %v1381 = vld [vmem:[%s1371 + $0x48] sm:$0xff]
    %v1382 = vld [vmem:[%s1371 + $0x50] sm:$0xff]
    %v1383 = vld [vmem:[%s1371 + $0x58] sm:$0xff]
    %v1384 = vld [vmem:[%s1371 + $0x60] sm:$0xff]
    %v1385 = vld [vmem:[%s1371 + $0x68] sm:$0xff]
    %v1386 = vld [vmem:[%s1371 + $0x70] sm:$0xff]
    %v1387 = vld [vmem:[%s1371 + $0x78] sm:$0xff]
    %v1388 = vrot.slane %v729, 4
    %v1389 = vrot.slane %v730, 4
    %v1390 = vsel %vm371, %v1388, %v1389
    %v1391 = vrot.slane %v731, 4
    %v1392 = vsel %vm371, %v1389, %v1391
    %v1411 = vunpack.c.l.b16 %v1372
    %v1412 = vunpack.c.h.b16 %v1372
    %v1413 = vunpack.c.l.b16 %v1373
    %v1414 = vunpack.c.h.b16 %v1373
    %v1415 = vunpack.c.l.b16 %v1374
    %v1416 = vunpack.c.h.b16 %v1374
    %v1417 = vunpack.c.l.b16 %v1375
    %v1418 = vunpack.c.h.b16 %v1375
    %v1419 = vunpack.c.l.b16 %v1376
    %v1420 = vunpack.c.h.b16 %v1376
    %v1421 = vunpack.c.l.b16 %v1377
    %v1422 = vunpack.c.h.b16 %v1377
    %v1423 = vunpack.c.l.b16 %v1378
    %v1424 = vunpack.c.h.b16 %v1378
    %v1425 = vunpack.c.l.b16 %v1379
    %v1426 = vunpack.c.h.b16 %v1379
    %v1427 = vunpack.c.l.b16 %v1380
    %v1428 = vunpack.c.h.b16 %v1380
    %v1429 = vunpack.c.l.b16 %v1381
    %v1430 = vunpack.c.h.b16 %v1381
    %v1431 = vunpack.c.l.b16 %v1382
    %v1432 = vunpack.c.h.b16 %v1382
    %v1433 = vunpack.c.l.b16 %v1383
    %v1434 = vunpack.c.h.b16 %v1383
    %v1435 = vunpack.c.l.b16 %v1384
    %v1436 = vunpack.c.h.b16 %v1384
    %v1437 = vunpack.c.l.b16 %v1385
    %v1438 = vunpack.c.h.b16 %v1385
    %v1439 = vunpack.c.l.b16 %v1386
    %v1440 = vunpack.c.h.b16 %v1386
    %v1441 = vunpack.c.l.b16 %v1387
    %v1442 = vunpack.c.h.b16 %v1387
    %v1443 = vpack.c.b16 %v1413, %v1411
    %v1444 = vpack.c.b16 %v1414, %v1412
    %v1445 = vpack.c.b16 %v1417, %v1415
    %v1446 = vpack.c.b16 %v1418, %v1416
    %v1447 = vpack.c.b16 %v1421, %v1419
    %v1448 = vpack.c.b16 %v1422, %v1420
    %v1449 = vpack.c.b16 %v1425, %v1423
    %v1450 = vpack.c.b16 %v1426, %v1424
    %v1451 = vpack.c.b16 %v1429, %v1427
    %v1452 = vpack.c.b16 %v1430, %v1428
    %v1453 = vpack.c.b16 %v1433, %v1431
    %v1454 = vpack.c.b16 %v1434, %v1432
    %v1455 = vpack.c.b16 %v1437, %v1435
    %v1456 = vpack.c.b16 %v1438, %v1436
    %v1457 = vpack.c.b16 %v1441, %v1439
    %v1458 = vpack.c.b16 %v1442, %v1440
    %1475 = vmatprep.subr.bf16.mxu0 %v1444
    %1476 = vmatpush1.bf16.msra.mxu0 %v1443
    %1477 = vmatprep.subr.bf16.mxu0 %v1446
    %1478 = vmatpush1.bf16.msra.mxu0 %v1445
    %1479 = vmatprep.subr.bf16.mxu0 %v1448
    %1480 = vmatpush1.bf16.msra.mxu0 %v1447
    %1481 = vmatprep.subr.bf16.mxu0 %v1450
    %1482 = vmatpush1.bf16.msra.mxu0 %v1449
    %1483 = vmatprep.subr.bf16.mxu0 %v1452
    %1484 = vmatpush1.bf16.msra.mxu0 %v1451
    %1485 = vmatprep.subr.bf16.mxu0 %v1454
    %1486 = vmatpush1.bf16.msra.mxu0 %v1453
    %1487 = vmatprep.subr.bf16.mxu0 %v1456
    %1488 = vmatpush1.bf16.msra.mxu0 %v1455
    %1489 = vmatprep.subr.bf16.mxu0 %v1458
    %1490 = vmatpush1.bf16.msra.mxu0 %v1457
    %1491 = vmatprep.subr.bf16.mxu0 0
    %1492 = vmatpush1.bf16.msra.mxu0 0
    %1493 = vmatprep.subr.bf16.mxu0 0
    %1494 = vmatpush1.bf16.msra.mxu0 0
    %1495 = vmatprep.subr.bf16.mxu0 0
    %1496 = vmatpush1.bf16.msra.mxu0 0
    %1497 = vmatprep.subr.bf16.mxu0 0
    %1498 = vmatpush1.bf16.msra.mxu0 0
    %1499 = vmatprep.subr.bf16.mxu0 0
    %1500 = vmatpush1.bf16.msra.mxu0 0
    %1501 = vmatprep.subr.bf16.mxu0 0
    %1502 = vmatpush1.bf16.msra.mxu0 0
    %1503 = vmatprep.subr.bf16.mxu0 0
    %1504 = vmatpush1.bf16.msra.mxu0 0
    %1505 = vmatprep.subr.bf16.mxu0 0
    %1506 = vmatpush1.bf16.msra.mxu0 0
    %1507 = vmatprep.mubr.bf16.mxu0 0
    %1508 = vmatmul.mubr.bf16.gmra.mrb[0].mxu0 %v1390
    %v1509 = vpop.f32.mrb[0].mxu0
    %v1510 = vadd.f32 0.0, %v1509
    %v1511 = vpop.f32.mrb[0].mxu0
    %v1512 = vadd.f32 0.0, %v1511
    %v1513 = vpop.f32.mrb[0].mxu0
    %v1514 = vadd.f32 0.0, %v1513
    %v1515 = vpop.f32.mrb[0].mxu0
    %v1516 = vadd.f32 0.0, %v1515
    %1517 = vmatprep.mubr.bf16.mxu0 0
    %1518 = vmatmul.mubr.bf16.gmra.mrb[0].mxu0 %v1392
    %v1519 = vpop.f32.mrb[0].mxu0
    %v1520 = vadd.f32 0.0, %v1519
    %v1521 = vpop.f32.mrb[0].mxu0
    %v1522 = vadd.f32 0.0, %v1521
    %v1523 = vpop.f32.mrb[0].mxu0
    %v1524 = vadd.f32 0.0, %v1523
    %v1525 = vpop.f32.mrb[0].mxu0
    %v1526 = vadd.f32 0.0, %v1525
    %1527 = vdwg.mxu0
    %v1528 = vadd.f32 %v1363, %v1510
    %v1529 = vadd.f32 %v1364, %v1512
    %v1530 = vadd.f32 %v1365, %v1514
    %v1531 = vadd.f32 %v1366, %v1516
    %v1532 = vadd.f32 %v1367, %v1520
    %v1533 = vadd.f32 %v1368, %v1522
    %v1534 = vadd.f32 %v1369, %v1524
    %v1535 = vadd.f32 %v1370, %v1526
    %v1536 = vadd.f32 %v1528, %v1530
    %v1537 = vadd.f32 %v1536, %v1532
    %v1538 = vadd.f32 %v1537, %v1534
    %v1539 = vrot.slane %v1538, 4
    %v1540 = vadd.f32 %v1538, %v1539
    %v1541 = vrot.slane %v1540, 2
    %v1542 = vadd.f32 %v1540, %v1541
    %v1543 = vrot.slane %v1542, 1
    %v1544 = vadd.f32 %v1542, %v1543
    %v1545 = vadd.f32 %v1529, %v1531
    %v1546 = vadd.f32 %v1545, %v1533
    %v1547 = vadd.f32 %v1546, %v1535
    %v1548 = vrot.slane %v1547, 4
    %v1549 = vadd.f32 %v1547, %v1548
    %v1550 = vrot.slane %v1549, 2
    %v1551 = vadd.f32 %v1549, %v1550
    %v1552 = vrot.slane %v1551, 1
    %v1553 = vadd.f32 %v1551, %v1552
    %v1554 = vmul.f32 %v1544, 0.03125
    %v1555 = vmul.f32 %v1553, 0.03125
    %v1556 = vsub.f32 %v1528, %v1554
    %v1557 = vsub.f32 %v1529, %v1555
    %v1558 = vsub.f32 %v1530, %v1554
    %v1559 = vsub.f32 %v1531, %v1555
    %v1560 = vsub.f32 %v1532, %v1554
    %v1561 = vsub.f32 %v1533, %v1555
    %v1562 = vsub.f32 %v1534, %v1554
    %v1563 = vsub.f32 %v1535, %v1555
    %v1564 = vmul.f32 %v1556, %v1556
    %v1565 = vmul.f32 %v1557, %v1557
    %v1566 = vmul.f32 %v1558, %v1558
    %v1567 = vmul.f32 %v1559, %v1559
    %v1568 = vmul.f32 %v1560, %v1560
    %v1569 = vmul.f32 %v1561, %v1561
    %v1570 = vmul.f32 %v1562, %v1562
    %v1571 = vmul.f32 %v1563, %v1563
    %v1572 = vadd.f32 %v1564, %v1566
    %v1573 = vadd.f32 %v1572, %v1568
    %v1574 = vadd.f32 %v1573, %v1570
    %v1575 = vrot.slane %v1574, 4
    %v1576 = vadd.f32 %v1574, %v1575
    %v1577 = vrot.slane %v1576, 2
    %v1578 = vadd.f32 %v1576, %v1577
    %v1579 = vrot.slane %v1578, 1
    %v1580 = vadd.f32 %v1578, %v1579
    %v1581 = vadd.f32 %v1565, %v1567
    %v1582 = vadd.f32 %v1581, %v1569
    %v1583 = vadd.f32 %v1582, %v1571
    %v1584 = vrot.slane %v1583, 4
    %v1585 = vadd.f32 %v1583, %v1584
    %v1586 = vrot.slane %v1585, 2
    %v1587 = vadd.f32 %v1585, %v1586
    %v1588 = vrot.slane %v1587, 1
    %v1589 = vadd.f32 %v1587, %v1588
    %v1590 = vmul.f32 %v1580, 0.03125
    %v1591 = vmul.f32 %v1589, 0.03125
    %v1592 = vadd.f32 %v1590, 1e-05
    %v1593 = vadd.f32 %v1591, 1e-05
    %v1594 = vrsqrt.pop %v1592
    %v1595 = vrsqrt.pop %v1593
    %v1596 = vmul.f32 %v1556, %v1594
    %v1597 = vmul.f32 %v1557, %v1595
    %v1598 = vmul.f32 %v1558, %v1594
    %v1599 = vmul.f32 %v1559, %v1595
    %v1600 = vmul.f32 %v1560, %v1594
    %v1601 = vmul.f32 %v1561, %v1595
    %v1602 = vmul.f32 %v1562, %v1594
    %v1603 = vmul.f32 %v1563, %v1595
    %v1604 = vld [vmem:[%s5] sm:$0x3]
    %v1606 = vlaneseq
    %v1607 = vshrl.u32 %v1606, 7
    %v1608 = vsub.s32 0, %v1607
    %v1609 = vrot.slane %v1604, %v1608
    %v1610 = vlaneseq
    %v1611 = vshrl.u32 %v1610, 7
    %v1612 = vsub.s32 1, %v1611
    %v1613 = vrot.slane %v1604, %v1612
    %v1616 = vmul.f32 %v1596, %v1609
    %v1617 = vmul.f32 %v1597, %v1613
    %v1618 = vmul.f32 %v1598, %v1609
    %v1619 = vmul.f32 %v1599, %v1613
    %v1620 = vmul.f32 %v1600, %v1609
    %v1621 = vmul.f32 %v1601, %v1613
    %v1622 = vmul.f32 %v1602, %v1609
    %v1623 = vmul.f32 %v1603, %v1613
    %v1624 = vld [vmem:[%s6] sm:$0x3]
    %v1626 = vlaneseq
    %v1627 = vshrl.u32 %v1626, 7
    %v1628 = vsub.s32 0, %v1627
    %v1629 = vrot.slane %v1624, %v1628
    %v1630 = vlaneseq
    %v1631 = vshrl.u32 %v1630, 7
    %v1632 = vsub.s32 1, %v1631
    %v1633 = vrot.slane %v1624, %v1632
    %v1636 = vadd.f32 %v1616, %v1629
    %v1637 = vadd.f32 %v1617, %v1633
    %v1638 = vadd.f32 %v1618, %v1629
    %v1639 = vadd.f32 %v1619, %v1633
    %v1640 = vadd.f32 %v1620, %v1629
    %v1641 = vadd.f32 %v1621, %v1633
    %v1642 = vadd.f32 %v1622, %v1629
    %v1643 = vadd.f32 %v1623, %v1633
    %v1644 = vmax.f32 %v1636, 0.0
    %v1645 = vmax.f32 %v1637, 0.0
    %v1646 = vmax.f32 %v1638, 0.0
    %v1647 = vmax.f32 %v1639, 0.0
    %v1648 = vmax.f32 %v1640, 0.0
    %v1649 = vmax.f32 %v1641, 0.0
    %v1650 = vmax.f32 %v1642, 0.0
    %v1651 = vmax.f32 %v1643, 0.0
    %v1654 = vrot.slane %v1644, 2
    %v1655 = vrot.slane %v1645, 2
    %v1664 = vrot.slane %v1644, 6
    %v1665 = vrot.slane %v1645, 6
    %v1666 = vrot.slane %v1646, 6
    %v1667 = vsel %vm89, %v1664, %v1666
    %v1668 = vrot.slane %v1647, 6
    %v1669 = vsel %vm89, %v1665, %v1668
    %v1670 = vrot.slane %v1648, 6
    %v1671 = vsel %vm89, %v1666, %v1670
    %v1672 = vrot.slane %v1649, 6
    %v1673 = vsel %vm89, %v1668, %v1672
    %v1674 = vrot.slane %v1650, 6
    %v1675 = vsel %vm89, %v1670, %v1674
    %v1676 = vrot.slane %v1651, 6
    %v1677 = vsel %vm89, %v1672, %v1676
    %v1688 = vrot.slane %v1650, 2
    %v1689 = vrot.slane %v1651, 2
    %v1692 = vsel %vm89, %v1654, %v1664
    %v1693 = vsel %vm89, %v1655, %v1665
    %v1694 = vsel %vm89, %v1674, %v1688
    %v1695 = vsel %vm89, %v1676, %v1689
    %v1696 = vpack.c.bf16 %v1667, %v1692
    %v1697 = vpack.c.bf16 %v1669, %v1693
    %v1698 = vpack.c.bf16 %v1675, %v1671
    %v1699 = vpack.c.bf16 %v1677, %v1673
    %v1700 = vpack.c.bf16 %v1694, %v1694
    %v1701 = vpack.c.bf16 %v1695, %v1695
    %v1702 = vld [vmem:[%s7] sm:$0xf]
    %v1703 = vld [vmem:[%s7 + $0x4] sm:$0xf]
    %v1704 = vld [vmem:[%s7 + $0x8] sm:$0xf]
    %v1705 = vld [vmem:[%s7 + $0xc] sm:$0xf]
    %v1706 = vld [vmem:[%s7 + $0x10] sm:$0xf]
    %v1707 = vld [vmem:[%s7 + $0x14] sm:$0xf]
    %v1708 = vld [vmem:[%s7 + $0x18] sm:$0xf]
    %v1709 = vld [vmem:[%s7 + $0x1c] sm:$0xf]
    %v1710 = vld [vmem:[%s7 + $0x20] sm:$0xf]
    %v1711 = vld [vmem:[%s7 + $0x24] sm:$0xf]
    %v1712 = vld [vmem:[%s7 + $0x28] sm:$0xf]
    %v1713 = vld [vmem:[%s7 + $0x2c] sm:$0xf]
    %v1714 = vld [vmem:[%s7 + $0x30] sm:$0xf]
    %v1715 = vld [vmem:[%s7 + $0x34] sm:$0xf]
    %v1716 = vld [vmem:[%s7 + $0x38] sm:$0xf]
    %v1717 = vld [vmem:[%s7 + $0x3c] sm:$0xf]
    %v1718 = vld [vmem:[%s7 + $0x40] sm:$0xf]
    %v1719 = vld [vmem:[%s7 + $0x44] sm:$0xf]
    %v1720 = vld [vmem:[%s7 + $0x48] sm:$0xf]
    %v1721 = vld [vmem:[%s7 + $0x4c] sm:$0xf]
    %v1722 = vld [vmem:[%s7 + $0x50] sm:$0xf]
    %v1723 = vld [vmem:[%s7 + $0x54] sm:$0xf]
    %v1724 = vld [vmem:[%s7 + $0x58] sm:$0xf]
    %v1725 = vld [vmem:[%s7 + $0x5c] sm:$0xf]
    %v1726 = vld [vmem:[%s7 + $0x60] sm:$0xf]
    %v1727 = vld [vmem:[%s7 + $0x64] sm:$0xf]
    %v1728 = vld [vmem:[%s7 + $0x68] sm:$0xf]
    %v1729 = vld [vmem:[%s7 + $0x6c] sm:$0xf]
    %v1730 = vld [vmem:[%s7 + $0x70] sm:$0xf]
    %v1731 = vld [vmem:[%s7 + $0x74] sm:$0xf]
    %v1732 = vld [vmem:[%s7 + $0x78] sm:$0xf]
    %v1733 = vld [vmem:[%s7 + $0x7c] sm:$0xf]
    %s1734 = scalar_lea.vmem %s7, 128
    %v1735 = vld [vmem:[%s1734] sm:$0xf]
    %v1736 = vld [vmem:[%s1734 + $0x4] sm:$0xf]
    %v1737 = vld [vmem:[%s1734 + $0x8] sm:$0xf]
    %v1738 = vld [vmem:[%s1734 + $0xc] sm:$0xf]
    %v1739 = vld [vmem:[%s1734 + $0x10] sm:$0xf]
    %v1740 = vld [vmem:[%s1734 + $0x14] sm:$0xf]
    %v1741 = vld [vmem:[%s1734 + $0x18] sm:$0xf]
    %v1742 = vld [vmem:[%s1734 + $0x1c] sm:$0xf]
    %v1743 = vld [vmem:[%s1734 + $0x20] sm:$0xf]
    %v1744 = vld [vmem:[%s1734 + $0x24] sm:$0xf]
    %v1745 = vld [vmem:[%s1734 + $0x28] sm:$0xf]
    %v1746 = vld [vmem:[%s1734 + $0x2c] sm:$0xf]
    %v1747 = vld [vmem:[%s1734 + $0x30] sm:$0xf]
    %v1748 = vld [vmem:[%s1734 + $0x34] sm:$0xf]
    %v1749 = vld [vmem:[%s1734 + $0x38] sm:$0xf]
    %v1750 = vld [vmem:[%s1734 + $0x3c] sm:$0xf]
    %v1751 = vld [vmem:[%s1734 + $0x40] sm:$0xf]
    %v1752 = vld [vmem:[%s1734 + $0x44] sm:$0xf]
    %v1753 = vld [vmem:[%s1734 + $0x48] sm:$0xf]
    %v1754 = vld [vmem:[%s1734 + $0x4c] sm:$0xf]
    %v1755 = vld [vmem:[%s1734 + $0x50] sm:$0xf]
    %v1756 = vld [vmem:[%s1734 + $0x54] sm:$0xf]
    %v1757 = vld [vmem:[%s1734 + $0x58] sm:$0xf]
    %v1758 = vld [vmem:[%s1734 + $0x5c] sm:$0xf]
    %v1759 = vld [vmem:[%s1734 + $0x60] sm:$0xf]
    %v1760 = vld [vmem:[%s1734 + $0x64] sm:$0xf]
    %v1761 = vld [vmem:[%s1734 + $0x68] sm:$0xf]
    %v1762 = vld [vmem:[%s1734 + $0x6c] sm:$0xf]
    %v1763 = vld [vmem:[%s1734 + $0x70] sm:$0xf]
    %v1764 = vld [vmem:[%s1734 + $0x74] sm:$0xf]
    %v1765 = vld [vmem:[%s1734 + $0x78] sm:$0xf]
    %v1766 = vld [vmem:[%s1734 + $0x7c] sm:$0xf]
    %v1773 = vrot.slane %v1696, 1
    %v1774 = vrot.slane %v1698, 1
    %v1775 = vsel %vm106, %v1773, %v1774
    %v1776 = vrot.slane %v1697, 1
    %v1777 = vrot.slane %v1699, 1
    %v1778 = vsel %vm106, %v1776, %v1777
    %v1779 = vrot.slane %v1700, 1
    %v1780 = vsel %vm106, %v1774, %v1779
    %v1781 = vrot.slane %v1701, 1
    %v1782 = vsel %vm106, %v1777, %v1781
    %v1819 = vunpack.c.l.b16 %v1735
    %v1820 = vunpack.c.l.b16 %v1736
    %v1821 = vunpack.c.l.b16 %v1737
    %v1822 = vunpack.c.l.b16 %v1738
    %v1823 = vunpack.c.l.b16 %v1739
    %v1824 = vunpack.c.l.b16 %v1740
    %v1825 = vunpack.c.l.b16 %v1741
    %v1826 = vunpack.c.l.b16 %v1742
    %v1827 = vunpack.c.l.b16 %v1743
    %v1828 = vunpack.c.l.b16 %v1744
    %v1829 = vunpack.c.l.b16 %v1745
    %v1830 = vunpack.c.l.b16 %v1746
    %v1831 = vunpack.c.l.b16 %v1747
    %v1832 = vunpack.c.l.b16 %v1748
    %v1833 = vunpack.c.l.b16 %v1749
    %v1834 = vunpack.c.l.b16 %v1750
    %v1835 = vunpack.c.l.b16 %v1751
    %v1836 = vunpack.c.l.b16 %v1752
    %v1837 = vunpack.c.l.b16 %v1753
    %v1838 = vunpack.c.l.b16 %v1754
    %v1839 = vunpack.c.l.b16 %v1755
    %v1840 = vunpack.c.l.b16 %v1756
    %v1841 = vunpack.c.l.b16 %v1757
    %v1842 = vunpack.c.l.b16 %v1758
    %v1843 = vunpack.c.l.b16 %v1759
    %v1844 = vunpack.c.l.b16 %v1760
    %v1845 = vunpack.c.l.b16 %v1761
    %v1846 = vunpack.c.l.b16 %v1762
    %v1847 = vunpack.c.l.b16 %v1763
    %v1848 = vunpack.c.l.b16 %v1764
    %v1849 = vunpack.c.l.b16 %v1765
    %v1850 = vunpack.c.l.b16 %v1766
    %v1851 = vpack.c.b16 %v1820, %v1819
    %v1852 = vpack.c.b16 %v1822, %v1821
    %v1853 = vpack.c.b16 %v1824, %v1823
    %v1854 = vpack.c.b16 %v1826, %v1825
    %v1855 = vpack.c.b16 %v1828, %v1827
    %v1856 = vpack.c.b16 %v1830, %v1829
    %v1857 = vpack.c.b16 %v1832, %v1831
    %v1858 = vpack.c.b16 %v1834, %v1833
    %v1859 = vpack.c.b16 %v1836, %v1835
    %v1860 = vpack.c.b16 %v1838, %v1837
    %v1861 = vpack.c.b16 %v1840, %v1839
    %v1862 = vpack.c.b16 %v1842, %v1841
    %v1863 = vpack.c.b16 %v1844, %v1843
    %v1864 = vpack.c.b16 %v1846, %v1845
    %v1865 = vpack.c.b16 %v1848, %v1847
    %v1866 = vpack.c.b16 %v1850, %v1849
    %1883 = vmatprep.subr.bf16.mxu0 0
    %1884 = vmatpush1.bf16.msra.mxu0 %v1851
    %1885 = vmatprep.subr.bf16.mxu0 0
    %1886 = vmatpush1.bf16.msra.mxu0 %v1852
    %1887 = vmatprep.subr.bf16.mxu0 0
    %1888 = vmatpush1.bf16.msra.mxu0 %v1853
    %1889 = vmatprep.subr.bf16.mxu0 0
    %1890 = vmatpush1.bf16.msra.mxu0 %v1854
    %1891 = vmatprep.subr.bf16.mxu0 0
    %1892 = vmatpush1.bf16.msra.mxu0 %v1855
    %1893 = vmatprep.subr.bf16.mxu0 0
    %1894 = vmatpush1.bf16.msra.mxu0 %v1856
    %1895 = vmatprep.subr.bf16.mxu0 0
    %1896 = vmatpush1.bf16.msra.mxu0 %v1857
    %1897 = vmatprep.subr.bf16.mxu0 0
    %1898 = vmatpush1.bf16.msra.mxu0 %v1858
    %1899 = vmatprep.subr.bf16.mxu0 0
    %1900 = vmatpush1.bf16.msra.mxu0 %v1859
    %1901 = vmatprep.subr.bf16.mxu0 0
    %1902 = vmatpush1.bf16.msra.mxu0 %v1860
    %1903 = vmatprep.subr.bf16.mxu0 0
    %1904 = vmatpush1.bf16.msra.mxu0 %v1861
    %1905 = vmatprep.subr.bf16.mxu0 0
    %1906 = vmatpush1.bf16.msra.mxu0 %v1862
    %1907 = vmatprep.subr.bf16.mxu0 0
    %1908 = vmatpush1.bf16.msra.mxu0 %v1863
    %1909 = vmatprep.subr.bf16.mxu0 0
    %1910 = vmatpush1.bf16.msra.mxu0 %v1864
    %1911 = vmatprep.subr.bf16.mxu0 0
    %1912 = vmatpush1.bf16.msra.mxu0 %v1865
    %1913 = vmatprep.subr.bf16.mxu0 0
    %1914 = vmatpush1.bf16.msra.mxu0 %v1866
    %1915 = vmatprep.mubr.bf16.mxu0 %v1778
    %1916 = vmatmul.mubr.bf16.gmra.mrb[0].mxu0 %v1775
    %v1917 = vpop.f32.mrb[0].mxu0
    %v1918 = vadd.f32 0.0, %v1917
    %v1919 = vpop.f32.mrb[0].mxu0
    %v1920 = vpop.f32.mrb[0].mxu0
    %v1921 = vadd.f32 0.0, %v1920
    %v1922 = vpop.f32.mrb[0].mxu0
    %1923 = vmatprep.mubr.bf16.mxu0 %v1782
    %1924 = vmatmul.mubr.bf16.gmra.mrb[0].mxu0 %v1780
    %v1925 = vpop.f32.mrb[0].mxu0
    %v1926 = vadd.f32 0.0, %v1925
    %v1927 = vpop.f32.mrb[0].mxu0
    %v1928 = vpop.f32.mrb[0].mxu0
    %v1929 = vadd.f32 0.0, %v1928
    %v1930 = vpop.f32.mrb[0].mxu0
    %1931 = vdwg.mxu0
    %v1964 = vunpack.c.l.b16 %v1702
    %v1965 = vunpack.c.l.b16 %v1703
    %v1966 = vunpack.c.l.b16 %v1704
    %v1967 = vunpack.c.l.b16 %v1705
    %v1968 = vunpack.c.l.b16 %v1706
    %v1969 = vunpack.c.l.b16 %v1707
    %v1970 = vunpack.c.l.b16 %v1708
    %v1971 = vunpack.c.l.b16 %v1709
    %v1972 = vunpack.c.l.b16 %v1710
    %v1973 = vunpack.c.l.b16 %v1711
    %v1974 = vunpack.c.l.b16 %v1712
    %v1975 = vunpack.c.l.b16 %v1713
    %v1976 = vunpack.c.l.b16 %v1714
    %v1977 = vunpack.c.l.b16 %v1715
    %v1978 = vunpack.c.l.b16 %v1716
    %v1979 = vunpack.c.l.b16 %v1717
    %v1980 = vunpack.c.l.b16 %v1718
    %v1981 = vunpack.c.l.b16 %v1719
    %v1982 = vunpack.c.l.b16 %v1720
    %v1983 = vunpack.c.l.b16 %v1721
    %v1984 = vunpack.c.l.b16 %v1722
    %v1985 = vunpack.c.l.b16 %v1723
    %v1986 = vunpack.c.l.b16 %v1724
    %v1987 = vunpack.c.l.b16 %v1725
    %v1988 = vunpack.c.l.b16 %v1726
    %v1989 = vunpack.c.l.b16 %v1727
    %v1990 = vunpack.c.l.b16 %v1728
    %v1991 = vunpack.c.l.b16 %v1729
    %v1992 = vunpack.c.l.b16 %v1730
    %v1993 = vunpack.c.l.b16 %v1731
    %v1994 = vunpack.c.l.b16 %v1732
    %v1995 = vunpack.c.l.b16 %v1733
    %v1996 = vpack.c.b16 %v1965, %v1964
    %v1997 = vpack.c.b16 %v1967, %v1966
    %v1998 = vpack.c.b16 %v1969, %v1968
    %v1999 = vpack.c.b16 %v1971, %v1970
    %v2000 = vpack.c.b16 %v1973, %v1972
    %v2001 = vpack.c.b16 %v1975, %v1974
    %v2002 = vpack.c.b16 %v1977, %v1976
    %v2003 = vpack.c.b16 %v1979, %v1978
    %v2004 = vpack.c.b16 %v1981, %v1980
    %v2005 = vpack.c.b16 %v1983, %v1982
    %v2006 = vpack.c.b16 %v1985, %v1984
    %v2007 = vpack.c.b16 %v1987, %v1986
    %v2008 = vpack.c.b16 %v1989, %v1988
    %v2009 = vpack.c.b16 %v1991, %v1990
    %v2010 = vpack.c.b16 %v1993, %v1992
    %v2011 = vpack.c.b16 %v1995, %v1994
    %2028 = vmatprep.subr.bf16.mxu0 0
    %2029 = vmatpush1.bf16.msra.mxu0 %v1996
    %2030 = vmatprep.subr.bf16.mxu0 0
    %2031 = vmatpush1.bf16.msra.mxu0 %v1997
    %2032 = vmatprep.subr.bf16.mxu0 0
    %2033 = vmatpush1.bf16.msra.mxu0 %v1998
    %2034 = vmatprep.subr.bf16.mxu0 0
    %2035 = vmatpush1.bf16.msra.mxu0 %v1999
    %2036 = vmatprep.subr.bf16.mxu0 0
    %2037 = vmatpush1.bf16.msra.mxu0 %v2000
    %2038 = vmatprep.subr.bf16.mxu0 0
    %2039 = vmatpush1.bf16.msra.mxu0 %v2001
    %2040 = vmatprep.subr.bf16.mxu0 0
    %2041 = vmatpush1.bf16.msra.mxu0 %v2002
    %2042 = vmatprep.subr.bf16.mxu0 0
    %2043 = vmatpush1.bf16.msra.mxu0 %v2003
    %2044 = vmatprep.subr.bf16.mxu0 0
    %2045 = vmatpush1.bf16.msra.mxu0 %v2004
    %2046 = vmatprep.subr.bf16.mxu0 0
    %2047 = vmatpush1.bf16.msra.mxu0 %v2005
    %2048 = vmatprep.subr.bf16.mxu0 0
    %2049 = vmatpush1.bf16.msra.mxu0 %v2006
    %2050 = vmatprep.subr.bf16.mxu0 0
    %2051 = vmatpush1.bf16.msra.mxu0 %v2007
    %2052 = vmatprep.subr.bf16.mxu0 0
    %2053 = vmatpush1.bf16.msra.mxu0 %v2008
    %2054 = vmatprep.subr.bf16.mxu0 0
    %2055 = vmatpush1.bf16.msra.mxu0 %v2009
    %2056 = vmatprep.subr.bf16.mxu0 0
    %2057 = vmatpush1.bf16.msra.mxu0 %v2010
    %2058 = vmatprep.subr.bf16.mxu0 0
    %2059 = vmatpush1.bf16.msra.mxu0 %v2011
    %2060 = vmatprep.mubr.bf16.mxu0 %v1697
    %2061 = vmatmul.mubr.bf16.gmra.mrb[0].mxu0 %v1696
    %v2062 = vpop.f32.mrb[0].mxu0
    %v2063 = vadd.f32 %v1918, %v2062
    %v2064 = vpop.f32.mrb[0].mxu0
    %v2065 = vpop.f32.mrb[0].mxu0
    %v2066 = vadd.f32 %v1921, %v2065
    %v2067 = vpop.f32.mrb[0].mxu0
    %2068 = vmatprep.mubr.bf16.mxu0 %v1699
    %2069 = vmatmul.mubr.bf16.gmra.mrb[0].mxu0 %v1698
    %v2070 = vpop.f32.mrb[0].mxu0
    %v2071 = vadd.f32 %v1926, %v2070
    %v2072 = vpop.f32.mrb[0].mxu0
    %v2073 = vpop.f32.mrb[0].mxu0
    %v2074 = vadd.f32 %v1929, %v2073
    %v2075 = vpop.f32.mrb[0].mxu0
    %2076 = vdwg.mxu0
    %s2077 = scalar_lea.vmem %s7, 256
    %v2078 = vld [vmem:[%s2077] sm:$0xf]
    %v2079 = vld [vmem:[%s2077 + $0x4] sm:$0xf]
    %v2080 = vld [vmem:[%s2077 + $0x8] sm:$0xf]
    %v2081 = vld [vmem:[%s2077 + $0xc] sm:$0xf]
    %v2082 = vld [vmem:[%s2077 + $0x10] sm:$0xf]
    %v2083 = vld [vmem:[%s2077 + $0x14] sm:$0xf]
    %v2084 = vld [vmem:[%s2077 + $0x18] sm:$0xf]
    %v2085 = vld [vmem:[%s2077 + $0x1c] sm:$0xf]
    %v2086 = vld [vmem:[%s2077 + $0x20] sm:$0xf]
    %v2087 = vld [vmem:[%s2077 + $0x24] sm:$0xf]
    %v2088 = vld [vmem:[%s2077 + $0x28] sm:$0xf]
    %v2089 = vld [vmem:[%s2077 + $0x2c] sm:$0xf]
    %v2090 = vld [vmem:[%s2077 + $0x30] sm:$0xf]
    %v2091 = vld [vmem:[%s2077 + $0x34] sm:$0xf]
    %v2092 = vld [vmem:[%s2077 + $0x38] sm:$0xf]
    %v2093 = vld [vmem:[%s2077 + $0x3c] sm:$0xf]
    %v2094 = vld [vmem:[%s2077 + $0x40] sm:$0xf]
    %v2095 = vld [vmem:[%s2077 + $0x44] sm:$0xf]
    %v2096 = vld [vmem:[%s2077 + $0x48] sm:$0xf]
    %v2097 = vld [vmem:[%s2077 + $0x4c] sm:$0xf]
    %v2098 = vld [vmem:[%s2077 + $0x50] sm:$0xf]
    %v2099 = vld [vmem:[%s2077 + $0x54] sm:$0xf]
    %v2100 = vld [vmem:[%s2077 + $0x58] sm:$0xf]
    %v2101 = vld [vmem:[%s2077 + $0x5c] sm:$0xf]
    %v2102 = vld [vmem:[%s2077 + $0x60] sm:$0xf]
    %v2103 = vld [vmem:[%s2077 + $0x64] sm:$0xf]
    %v2104 = vld [vmem:[%s2077 + $0x68] sm:$0xf]
    %v2105 = vld [vmem:[%s2077 + $0x6c] sm:$0xf]
    %v2106 = vld [vmem:[%s2077 + $0x70] sm:$0xf]
    %v2107 = vld [vmem:[%s2077 + $0x74] sm:$0xf]
    %v2108 = vld [vmem:[%s2077 + $0x78] sm:$0xf]
    %v2109 = vld [vmem:[%s2077 + $0x7c] sm:$0xf]
    %v2110 = vrot.slane %v1696, 2
    %v2111 = vrot.slane %v1698, 2
    %v2112 = vsel %vm231, %v2110, %v2111
    %v2113 = vrot.slane %v1697, 2
    %v2114 = vrot.slane %v1699, 2
    %v2115 = vsel %vm231, %v2113, %v2114
    %v2116 = vrot.slane %v1700, 2
    %v2117 = vsel %vm231, %v2111, %v2116
    %v2118 = vrot.slane %v1701, 2
    %v2119 = vsel %vm231, %v2114, %v2118
    %v2156 = vunpack.c.l.b16 %v2078
    %v2157 = vunpack.c.l.b16 %v2079
    %v2158 = vunpack.c.l.b16 %v2080
    %v2159 = vunpack.c.l.b16 %v2081
    %v2160 = vunpack.c.l.b16 %v2082
    %v2161 = vunpack.c.l.b16 %v2083
    %v2162 = vunpack.c.l.b16 %v2084
    %v2163 = vunpack.c.l.b16 %v2085
    %v2164 = vunpack.c.l.b16 %v2086
    %v2165 = vunpack.c.l.b16 %v2087
    %v2166 = vunpack.c.l.b16 %v2088
    %v2167 = vunpack.c.l.b16 %v2089
    %v2168 = vunpack.c.l.b16 %v2090
    %v2169 = vunpack.c.l.b16 %v2091
    %v2170 = vunpack.c.l.b16 %v2092
    %v2171 = vunpack.c.l.b16 %v2093
    %v2172 = vunpack.c.l.b16 %v2094
    %v2173 = vunpack.c.l.b16 %v2095
    %v2174 = vunpack.c.l.b16 %v2096
    %v2175 = vunpack.c.l.b16 %v2097
    %v2176 = vunpack.c.l.b16 %v2098
    %v2177 = vunpack.c.l.b16 %v2099
    %v2178 = vunpack.c.l.b16 %v2100
    %v2179 = vunpack.c.l.b16 %v2101
    %v2180 = vunpack.c.l.b16 %v2102
    %v2181 = vunpack.c.l.b16 %v2103
    %v2182 = vunpack.c.l.b16 %v2104
    %v2183 = vunpack.c.l.b16 %v2105
    %v2184 = vunpack.c.l.b16 %v2106
    %v2185 = vunpack.c.l.b16 %v2107
    %v2186 = vunpack.c.l.b16 %v2108
    %v2187 = vunpack.c.l.b16 %v2109
    %v2188 = vpack.c.b16 %v2157, %v2156
    %v2189 = vpack.c.b16 %v2159, %v2158
    %v2190 = vpack.c.b16 %v2161, %v2160
    %v2191 = vpack.c.b16 %v2163, %v2162
    %v2192 = vpack.c.b16 %v2165, %v2164
    %v2193 = vpack.c.b16 %v2167, %v2166
    %v2194 = vpack.c.b16 %v2169, %v2168
    %v2195 = vpack.c.b16 %v2171, %v2170
    %v2196 = vpack.c.b16 %v2173, %v2172
    %v2197 = vpack.c.b16 %v2175, %v2174
    %v2198 = vpack.c.b16 %v2177, %v2176
    %v2199 = vpack.c.b16 %v2179, %v2178
    %v2200 = vpack.c.b16 %v2181, %v2180
    %v2201 = vpack.c.b16 %v2183, %v2182
    %v2202 = vpack.c.b16 %v2185, %v2184
    %v2203 = vpack.c.b16 %v2187, %v2186
    %2220 = vmatprep.subr.bf16.mxu0 0
    %2221 = vmatpush1.bf16.msra.mxu0 %v2188
    %2222 = vmatprep.subr.bf16.mxu0 0
    %2223 = vmatpush1.bf16.msra.mxu0 %v2189
    %2224 = vmatprep.subr.bf16.mxu0 0
    %2225 = vmatpush1.bf16.msra.mxu0 %v2190
    %2226 = vmatprep.subr.bf16.mxu0 0
    %2227 = vmatpush1.bf16.msra.mxu0 %v2191
    %2228 = vmatprep.subr.bf16.mxu0 0
    %2229 = vmatpush1.bf16.msra.mxu0 %v2192
    %2230 = vmatprep.subr.bf16.mxu0 0
    %2231 = vmatpush1.bf16.msra.mxu0 %v2193
    %2232 = vmatprep.subr.bf16.mxu0 0
    %2233 = vmatpush1.bf16.msra.mxu0 %v2194
    %2234 = vmatprep.subr.bf16.mxu0 0
    %2235 = vmatpush1.bf16.msra.mxu0 %v2195
    %2236 = vmatprep.subr.bf16.mxu0 0
    %2237 = vmatpush1.bf16.msra.mxu0 %v2196
    %2238 = vmatprep.subr.bf16.mxu0 0
    %2239 = vmatpush1.bf16.msra.mxu0 %v2197
    %2240 = vmatprep.subr.bf16.mxu0 0
    %2241 = vmatpush1.bf16.msra.mxu0 %v2198
    %2242 = vmatprep.subr.bf16.mxu0 0
    %2243 = vmatpush1.bf16.msra.mxu0 %v2199
    %2244 = vmatprep.subr.bf16.mxu0 0
    %2245 = vmatpush1.bf16.msra.mxu0 %v2200
    %2246 = vmatprep.subr.bf16.mxu0 0
    %2247 = vmatpush1.bf16.msra.mxu0 %v2201
    %2248 = vmatprep.subr.bf16.mxu0 0
    %2249 = vmatpush1.bf16.msra.mxu0 %v2202
    %2250 = vmatprep.subr.bf16.mxu0 0
    %2251 = vmatpush1.bf16.msra.mxu0 %v2203
    %2252 = vmatprep.mubr.bf16.mxu0 %v2115
    %2253 = vmatmul.mubr.bf16.gmra.mrb[0].mxu0 %v2112
    %v2254 = vpop.f32.mrb[0].mxu0
    %v2255 = vadd.f32 0.0, %v2254
    %v2256 = vpop.f32.mrb[0].mxu0
    %v2257 = vpop.f32.mrb[0].mxu0
    %v2258 = vadd.f32 0.0, %v2257
    %v2259 = vpop.f32.mrb[0].mxu0
    %2260 = vmatprep.mubr.bf16.mxu0 %v2119
    %2261 = vmatmul.mubr.bf16.gmra.mrb[0].mxu0 %v2117
    %v2262 = vpop.f32.mrb[0].mxu0
    %v2263 = vadd.f32 0.0, %v2262
    %v2264 = vpop.f32.mrb[0].mxu0
    %v2265 = vpop.f32.mrb[0].mxu0
    %v2266 = vadd.f32 0.0, %v2265
    %v2267 = vpop.f32.mrb[0].mxu0
    %2268 = vdwg.mxu0
    %v2269 = vadd.f32 %v2063, %v2255
    %v2270 = vadd.f32 %v2066, %v2258
    %v2271 = vadd.f32 %v2071, %v2263
    %v2272 = vadd.f32 %v2074, %v2266
    %vm2273 = vcmask 64512
    %v2274 = vsel %vm2273, %v2269, 0.0
    %v2275 = vsel %vm2273, %v2270, 0.0
    %v2276 = vadd.f32 %v2274, %v2275
    %v2277 = vsel %vm2273, %v2271, 0.0
    %v2278 = vadd.f32 %v2276, %v2277
    %v2279 = vsel %vm2273, %v2272, 0.0
    %v2280 = vadd.f32 %v2278, %v2279
    %v2281 = vrot.slane %v2280, 4
    %v2282 = vadd.f32 %v2280, %v2281
    %v2283 = vrot.slane %v2282, 2
    %v2284 = vadd.f32 %v2282, %v2283
    %v2285 = vrot.slane %v2284, 1
    %v2286 = vadd.f32 %v2284, %v2285
    %v2287 = vmul.f32 %v2286, 0.03125
    %v2288 = vsub.f32 %v2269, %v2287
    %v2289 = vsub.f32 %v2270, %v2287
    %v2290 = vsub.f32 %v2271, %v2287
    %v2291 = vsub.f32 %v2272, %v2287
    %v2292 = vmul.f32 %v2288, %v2288
    %v2293 = vmul.f32 %v2289, %v2289
    %v2294 = vmul.f32 %v2290, %v2290
    %v2295 = vmul.f32 %v2291, %v2291
    %v2296 = vsel %vm2273, %v2292, 0.0
    %v2297 = vsel %vm2273, %v2293, 0.0
    %v2298 = vadd.f32 %v2296, %v2297
    %v2299 = vsel %vm2273, %v2294, 0.0
    %v2300 = vadd.f32 %v2298, %v2299
    %v2301 = vsel %vm2273, %v2295, 0.0
    %v2302 = vadd.f32 %v2300, %v2301
    %v2303 = vrot.slane %v2302, 4
    %v2304 = vadd.f32 %v2302, %v2303
    %v2305 = vrot.slane %v2304, 2
    %v2306 = vadd.f32 %v2304, %v2305
    %v2307 = vrot.slane %v2306, 1
    %v2308 = vadd.f32 %v2306, %v2307
    %v2309 = vmul.f32 %v2308, 0.03125
    %v2310 = vadd.f32 %v2309, 1e-05
    %v2311 = vrsqrt.pop %v2310
    %v2312 = vmul.f32 %v2288, %v2311
    %v2313 = vmul.f32 %v2289, %v2311
    %v2314 = vmul.f32 %v2290, %v2311
    %v2315 = vmul.f32 %v2291, %v2311
    %v2316 = vld [vmem:[%s8] sm:$0x1]
    %v2318 = vlaneseq
    %v2319 = vshrl.u32 %v2318, 7
    %v2320 = vsub.s32 0, %v2319
    %v2321 = vrot.slane %v2316, %v2320
    %v2323 = vmul.f32 %v2312, %v2321
    %v2324 = vmul.f32 %v2313, %v2321
    %v2325 = vmul.f32 %v2314, %v2321
    %v2326 = vmul.f32 %v2315, %v2321
    %v2327 = vld [vmem:[%s9] sm:$0x1]
    %v2329 = vlaneseq
    %v2330 = vshrl.u32 %v2329, 7
    %v2331 = vsub.s32 0, %v2330
    %v2332 = vrot.slane %v2327, %v2331
    %v2334 = vadd.f32 %v2323, %v2332
    %v2335 = vadd.f32 %v2324, %v2332
    %v2336 = vadd.f32 %v2325, %v2332
    %v2337 = vadd.f32 %v2326, %v2332
    %v2338 = vmax.f32 %v2334, 0.0
    %v2339 = vmax.f32 %v2335, 0.0
    %v2340 = vmax.f32 %v2336, 0.0
    %v2341 = vmax.f32 %v2337, 0.0
    %v2342 = vld [vmem:[%s11] sm:$0x1]
    %v2344 = vrot.slane %v2338, 2
    %v2346 = vadd.f32 %v2338, %v2344
    %v2347 = vrot.slane %v2338, 4
    %v2349 = vadd.f32 %v2346, %v2347
    %v2350 = vrot.slane %v2338, 6
    %v2352 = vadd.f32 %v2349, %v2350
    %v2353 = vadd.f32 %v2352, %v2339
    %v2355 = vrot.slane %v2339, 2
    %v2357 = vadd.f32 %v2353, %v2355
    %v2358 = vrot.slane %v2339, 4
    %v2360 = vadd.f32 %v2357, %v2358
    %v2361 = vrot.slane %v2339, 6
    %v2363 = vadd.f32 %v2360, %v2361
    %v2364 = vmul.f32 %v2363, 0.125
    %v2365 = vld [vmem:[%s10] sm:$0xff]
    %v2367 = vsel %vm2273, %v2364, 0
    %2369 = vmatprep.subr.mxu0 0.0
    %2370 = vmatpush1.msra.mxu0 %v2365
    %2371 = vmatprep.subr.mxu0 0.0
    %2372 = vmatpush1.msra.mxu0 0.0
    %2373 = vmatprep.subr.mxu0 0.0
    %2374 = vmatpush1.msra.mxu0 0.0
    %2375 = vmatprep.subr.mxu0 0.0
    %2376 = vmatpush1.msra.mxu0 0.0
    %2377 = vmatprep.subr.mxu0 0.0
    %2378 = vmatpush1.msra.mxu0 0.0
    %2379 = vmatprep.subr.mxu0 0.0
    %2380 = vmatpush1.msra.mxu0 0.0
    %2381 = vmatprep.subr.mxu0 0.0
    %2382 = vmatpush1.msra.mxu0 0.0
    %2383 = vmatprep.subr.mxu0 0.0
    %2384 = vmatpush1.msra.mxu0 0.0
    %2385 = vmatprep.subr.mxu0 0.0
    %2386 = vmatpush1.msra.mxu0 0.0
    %2387 = vmatprep.subr.mxu0 0.0
    %2388 = vmatpush1.msra.mxu0 0.0
    %2389 = vmatprep.subr.mxu0 0.0
    %2390 = vmatpush1.msra.mxu0 0.0
    %2391 = vmatprep.subr.mxu0 0.0
    %2392 = vmatpush1.msra.mxu0 0.0
    %2393 = vmatprep.subr.mxu0 0.0
    %2394 = vmatpush1.msra.mxu0 0.0
    %2395 = vmatprep.subr.mxu0 0.0
    %2396 = vmatpush1.msra.mxu0 0.0
    %2397 = vmatprep.subr.mxu0 0.0
    %2398 = vmatpush1.msra.mxu0 0.0
    %2399 = vmatprep.subr.mxu0 0.0
    %2400 = vmatpush1.msra.mxu0 0.0
    %2401 = vmatprep.subr.mxu0 0.0
    %2402 = vmatpush1.msra.mxu0 0.0
    %2403 = vmatprep.subr.mxu0 0.0
    %2404 = vmatpush1.msra.mxu0 0.0
    %2405 = vmatprep.subr.mxu0 0.0
    %2406 = vmatpush1.msra.mxu0 0.0
    %2407 = vmatprep.subr.mxu0 0.0
    %2408 = vmatpush1.msra.mxu0 0.0
    %2409 = vmatprep.subr.mxu0 0.0
    %2410 = vmatpush1.msra.mxu0 0.0
    %2411 = vmatprep.subr.mxu0 0.0
    %2412 = vmatpush1.msra.mxu0 0.0
    %2413 = vmatprep.subr.mxu0 0.0
    %2414 = vmatpush1.msra.mxu0 0.0
    %2415 = vmatprep.subr.mxu0 0.0
    %2416 = vmatpush1.msra.mxu0 0.0
    %2417 = vmatprep.subr.mxu0 0.0
    %2418 = vmatpush1.msra.mxu0 0.0
    %2419 = vmatprep.subr.mxu0 0.0
    %2420 = vmatpush1.msra.mxu0 0.0
    %2421 = vmatprep.subr.mxu0 0.0
    %2422 = vmatpush1.msra.mxu0 0.0
    %2423 = vmatprep.subr.mxu0 0.0
    %2424 = vmatpush1.msra.mxu0 0.0
    %2425 = vmatprep.subr.mxu0 0.0
    %2426 = vmatpush1.msra.mxu0 0.0
    %2427 = vmatprep.subr.mxu0 0.0
    %2428 = vmatpush1.msra.mxu0 0.0
    %2429 = vmatprep.subr.mxu0 0.0
    %2430 = vmatpush1.msra.mxu0 0.0
    %2431 = vmatprep.subr.mxu0 0.0
    %2432 = vmatpush1.msra.mxu0 0.0
    %2433 = vmatprep.mubr.f32.mxu0 0.0
    %2434 = vmatmul.mubr.f32.gmra.mrb[0].mxu0 %v2367
    %v2435 = vpop.f32.mrb[0].mxu0
    %v2436 = vadd.f32 0.0, %v2435
    %v2437 = vpop.f32.mrb[0].mxu0
    %2438 = vdwg.mxu0
    %v2440 = vlaneseq
    %v2441 = vshrl.u32 %v2440, 7
    %v2442 = vsub.s32 0, %v2441
    %v2443 = vrot.slane %v2342, %v2442
    %v2445 = vadd.f32 %v2443, %v2436
    %v2447 = vrot.slane %v2340, 2
    %v2449 = vadd.f32 %v2340, %v2447
    %v2450 = vrot.slane %v2340, 4
    %v2452 = vadd.f32 %v2449, %v2450
    %v2453 = vrot.slane %v2340, 6
    %v2455 = vadd.f32 %v2452, %v2453
    %v2456 = vadd.f32 %v2455, %v2341
    %v2458 = vrot.slane %v2341, 2
    %v2460 = vadd.f32 %v2456, %v2458
    %v2461 = vrot.slane %v2341, 4
    %v2463 = vadd.f32 %v2460, %v2461
    %v2464 = vrot.slane %v2341, 6
    %v2466 = vadd.f32 %v2463, %v2464
    %v2467 = vmul.f32 %v2466, 0.125
    %s2468 = scalar_lea.vmem %s10, 8
    %v2469 = vld [vmem:[%s2468] sm:$0xff]
    %v2471 = vsel %vm2273, %v2467, 0
    %2473 = vmatprep.subr.mxu0 0.0
    %2474 = vmatpush1.msra.mxu0 %v2469
    %2475 = vmatprep.subr.mxu0 0.0
    %2476 = vmatpush1.msra.mxu0 0.0
    %2477 = vmatprep.subr.mxu0 0.0
    %2478 = vmatpush1.msra.mxu0 0.0
    %2479 = vmatprep.subr.mxu0 0.0
    %2480 = vmatpush1.msra.mxu0 0.0
    %2481 = vmatprep.subr.mxu0 0.0
    %2482 = vmatpush1.msra.mxu0 0.0
    %2483 = vmatprep.subr.mxu0 0.0
    %2484 = vmatpush1.msra.mxu0 0.0
    %2485 = vmatprep.subr.mxu0 0.0
    %2486 = vmatpush1.msra.mxu0 0.0
    %2487 = vmatprep.subr.mxu0 0.0
    %2488 = vmatpush1.msra.mxu0 0.0
    %2489 = vmatprep.subr.mxu0 0.0
    %2490 = vmatpush1.msra.mxu0 0.0
    %2491 = vmatprep.subr.mxu0 0.0
    %2492 = vmatpush1.msra.mxu0 0.0
    %2493 = vmatprep.subr.mxu0 0.0
    %2494 = vmatpush1.msra.mxu0 0.0
    %2495 = vmatprep.subr.mxu0 0.0
    %2496 = vmatpush1.msra.mxu0 0.0
    %2497 = vmatprep.subr.mxu0 0.0
    %2498 = vmatpush1.msra.mxu0 0.0
    %2499 = vmatprep.subr.mxu0 0.0
    %2500 = vmatpush1.msra.mxu0 0.0
    %2501 = vmatprep.subr.mxu0 0.0
    %2502 = vmatpush1.msra.mxu0 0.0
    %2503 = vmatprep.subr.mxu0 0.0
    %2504 = vmatpush1.msra.mxu0 0.0
    %2505 = vmatprep.subr.mxu0 0.0
    %2506 = vmatpush1.msra.mxu0 0.0
    %2507 = vmatprep.subr.mxu0 0.0
    %2508 = vmatpush1.msra.mxu0 0.0
    %2509 = vmatprep.subr.mxu0 0.0
    %2510 = vmatpush1.msra.mxu0 0.0
    %2511 = vmatprep.subr.mxu0 0.0
    %2512 = vmatpush1.msra.mxu0 0.0
    %2513 = vmatprep.subr.mxu0 0.0
    %2514 = vmatpush1.msra.mxu0 0.0
    %2515 = vmatprep.subr.mxu0 0.0
    %2516 = vmatpush1.msra.mxu0 0.0
    %2517 = vmatprep.subr.mxu0 0.0
    %2518 = vmatpush1.msra.mxu0 0.0
    %2519 = vmatprep.subr.mxu0 0.0
    %2520 = vmatpush1.msra.mxu0 0.0
    %2521 = vmatprep.subr.mxu0 0.0
    %2522 = vmatpush1.msra.mxu0 0.0
    %2523 = vmatprep.subr.mxu0 0.0
    %2524 = vmatpush1.msra.mxu0 0.0
    %2525 = vmatprep.subr.mxu0 0.0
    %2526 = vmatpush1.msra.mxu0 0.0
    %2527 = vmatprep.subr.mxu0 0.0
    %2528 = vmatpush1.msra.mxu0 0.0
    %2529 = vmatprep.subr.mxu0 0.0
    %2530 = vmatpush1.msra.mxu0 0.0
    %2531 = vmatprep.subr.mxu0 0.0
    %2532 = vmatpush1.msra.mxu0 0.0
    %2533 = vmatprep.subr.mxu0 0.0
    %2534 = vmatpush1.msra.mxu0 0.0
    %2535 = vmatprep.subr.mxu0 0.0
    %2536 = vmatpush1.msra.mxu0 0.0
    %2537 = vmatprep.mubr.f32.mxu0 0.0
    %2538 = vmatmul.mubr.f32.gmra.mrb[0].mxu0 %v2471
    %v2539 = vpop.f32.mrb[0].mxu0
    %v2540 = vadd.f32 0.0, %v2539
    %v2541 = vpop.f32.mrb[0].mxu0
    %2542 = vdwg.mxu0
    %v2543 = vadd.f32 %v2445, %v2540
    %v2544 = vld [vmem:[%s12] sm:$0xf]
    %v2545 = vld [vmem:[%s13] sm:$0x1]
    %v2547 = vlaneseq
    %v2548 = vshrl.u32 %v2547, 7
    %v2549 = vsub.s32 0, %v2548
    %v2550 = vrot.slane %v2545, %v2549
    %v2553 = vsel %vm112, %v2543, 0
    %v2556 = vsel %vm91, %v2544, 0
    %2558 = vmatprep.subr.mxu0 0.0
    %2559 = vmatpush1.msra.mxu0 %v2556
    %2560 = vmatprep.subr.mxu0 0.0
    %2561 = vmatpush1.msra.mxu0 0.0
    %2562 = vmatprep.subr.mxu0 0.0
    %2563 = vmatpush1.msra.mxu0 0.0
    %2564 = vmatprep.subr.mxu0 0.0
    %2565 = vmatpush1.msra.mxu0 0.0
    %2566 = vmatprep.subr.mxu0 0.0
    %2567 = vmatpush1.msra.mxu0 0.0
    %2568 = vmatprep.subr.mxu0 0.0
    %2569 = vmatpush1.msra.mxu0 0.0
    %2570 = vmatprep.subr.mxu0 0.0
    %2571 = vmatpush1.msra.mxu0 0.0
    %2572 = vmatprep.subr.mxu0 0.0
    %2573 = vmatpush1.msra.mxu0 0.0
    %2574 = vmatprep.subr.mxu0 0.0
    %2575 = vmatpush1.msra.mxu0 0.0
    %2576 = vmatprep.subr.mxu0 0.0
    %2577 = vmatpush1.msra.mxu0 0.0
    %2578 = vmatprep.subr.mxu0 0.0
    %2579 = vmatpush1.msra.mxu0 0.0
    %2580 = vmatprep.subr.mxu0 0.0
    %2581 = vmatpush1.msra.mxu0 0.0
    %2582 = vmatprep.subr.mxu0 0.0
    %2583 = vmatpush1.msra.mxu0 0.0
    %2584 = vmatprep.subr.mxu0 0.0
    %2585 = vmatpush1.msra.mxu0 0.0
    %2586 = vmatprep.subr.mxu0 0.0
    %2587 = vmatpush1.msra.mxu0 0.0
    %2588 = vmatprep.subr.mxu0 0.0
    %2589 = vmatpush1.msra.mxu0 0.0
    %2590 = vmatprep.subr.mxu0 0.0
    %2591 = vmatpush1.msra.mxu0 0.0
    %2592 = vmatprep.subr.mxu0 0.0
    %2593 = vmatpush1.msra.mxu0 0.0
    %2594 = vmatprep.subr.mxu0 0.0
    %2595 = vmatpush1.msra.mxu0 0.0
    %2596 = vmatprep.subr.mxu0 0.0
    %2597 = vmatpush1.msra.mxu0 0.0
    %2598 = vmatprep.subr.mxu0 0.0
    %2599 = vmatpush1.msra.mxu0 0.0
    %2600 = vmatprep.subr.mxu0 0.0
    %2601 = vmatpush1.msra.mxu0 0.0
    %2602 = vmatprep.subr.mxu0 0.0
    %2603 = vmatpush1.msra.mxu0 0.0
    %2604 = vmatprep.subr.mxu0 0.0
    %2605 = vmatpush1.msra.mxu0 0.0
    %2606 = vmatprep.subr.mxu0 0.0
    %2607 = vmatpush1.msra.mxu0 0.0
    %2608 = vmatprep.subr.mxu0 0.0
    %2609 = vmatpush1.msra.mxu0 0.0
    %2610 = vmatprep.subr.mxu0 0.0
    %2611 = vmatpush1.msra.mxu0 0.0
    %2612 = vmatprep.subr.mxu0 0.0
    %2613 = vmatpush1.msra.mxu0 0.0
    %2614 = vmatprep.subr.mxu0 0.0
    %2615 = vmatpush1.msra.mxu0 0.0
    %2616 = vmatprep.subr.mxu0 0.0
    %2617 = vmatpush1.msra.mxu0 0.0
    %2618 = vmatprep.subr.mxu0 0.0
    %2619 = vmatpush1.msra.mxu0 0.0
    %2620 = vmatprep.subr.mxu0 0.0
    %2621 = vmatpush1.msra.mxu0 0.0
    %2622 = vmatprep.mubr.f32.mxu0 0.0
    %2623 = vmatmul.mubr.f32.gmra.mrb[0].mxu0 %v2553
    %v2624 = vpop.f32.mrb[0].mxu0
    %v2625 = vadd.f32 %v2550, %v2624
    %v2626 = vpop.f32.mrb[0].mxu0
    %2627 = vdwg.mxu0
    %2628 = vst [vmem:[#allocation5] sm:$0x3] %v2625
    // Predicated region
    $region62: #{downstream_forward.1} parent=1 // pred_check
      _
    $region63: #{downstream_forward.1} parent=1 // pred_check_branch
      %2630 = sbr.rel (0) target = $region65
    $region64: #{downstream_forward.1} parent=1 // pred_region
      %s2632 = ssub.s32 32, 32
      %2633 = vsyncadd [#allocation4], %s2632
      %s2635 = sshll.u32 [#allocation5], 4
      %s2636 = int_to_ptr.vmem [resolvable:$true] %s2635
      %2638 = dma.vmem_to_hbm [thread:$0]  %s2636, 32, %s14, [#allocation4]
    $region65: #{downstream_forward.1} parent=1 // pred_fallthru
      _
    // Predicated region
    $region66: #{downstream_forward.1} parent=1 // pred_check
      _
    $region67: #{downstream_forward.1} parent=1 // pred_check_branch
      %2640 = sbr.rel (0) target = $region69
    $region68: #{downstream_forward.1} parent=1 // pred_region
      %2641 = dma.done [#allocation4], 32
    $region69: #{downstream_forward.1} parent=1 // pred_fallthru
      _
    %2642 = vsyncpa [#allocation3], 1
    %2643 = vsyncpa [#allocation4], 1

</llo_original>
